<compile_context>
chip_gen: v7x
topology: tpu7x:2x2x1
jax: 0.10.0
libtpu: 0.0.40
codegen_flags: <defaults>
</compile_context>

<pallas_src>
import math
import functools

import jax
import jax.numpy as jnp
from jax.experimental import pallas as pl
from jax.experimental.pallas import tpu as pltpu

F = 128             # padded feature width for matmuls (lane dim)
N_MAIN = 9          # enc1..enc4 (0..3), dec1..dec5 (4..8); mu/logvar fused
TB_CAP = 1024       # max batch tile (sublanes)
APPROX_GELU = True  # tanh GELU -> EUP slot (fast). False = erf parity with
                    # torch.nn.GELU() default (slower: long VALU polynomial).


def _round8(n):
    return -(-n // 8) * 8


def _gelu(v):
    if APPROX_GELU:
        return jax.nn.gelu(v, approximate=True)
    vf = v.astype(jnp.float32)
    return (0.5 * vf * (1.0 + jax.lax.erf(vf * (1.0 / math.sqrt(2.0))))
            ).astype(v.dtype)


def vae_kernel(x_ref, eps_ref, wm_ref, bm_ref, wh_ref, bh_ref,
               dec_ref, mu_ref, lv_ref, *, in_pad, code_pad):
    """Whole VAE forward for one batch tile.

    x_ref   : (TB, F)   bf16 padded input
    eps_ref : (TB, F)   bf16 N(0,1) noise, zero outside the real code lanes
    wm_ref  : (9, F, F) bf16 padded weights (in,out): enc1..4, dec1..5
    bm_ref  : (9, 1, F) f32 padded biases
    wh_ref  : (F, 2F)   bf16 fused mu|logvar head weights
    bh_ref  : (1, 2F)   f32 fused mu|logvar head biases
    dec_ref : (TB, in_pad)   f32 decoded (real input width, rounded to 8)
    mu_ref  : (TB, code_pad) f32
    lv_ref  : (TB, code_pad) f32
    """
    def layer(h, i):
        # MXU matmul, f32 accumulate + bias; elementwise GELU runs in bf16 so
        # the result feeds the next matmul directly.
        acc = jnp.dot(h, wm_ref[i], preferred_element_type=jnp.float32)
        return _gelu((acc + bm_ref[i]).astype(jnp.bfloat16))

    # ----- encoder: 4 x (Linear + GELU) -----
    h = x_ref[...]
    for i in range(4):
        h = layer(h, i)

    # ----- fused mu / logvar heads: one (TB,128)@(128,256) matmul -----
    heads = (jnp.dot(h, wh_ref[...], preferred_element_type=jnp.float32)
             + bh_ref[...])
    # store early (narrow, real-width slices): frees live values before the
    # five decoder matmuls and lets the output DMA start sooner.
    mu_ref[...] = heads[:, :code_pad]
    lv_ref[...] = heads[:, F:F + code_pad]

    # ----- reparameterize: z = mu + eps * exp(0.5*logvar) (f32, full width;
    # padded logvar lanes are 0 -> std=1, padded eps/mu lanes are 0 -> z=0) --
    mu_full = heads[:, :F]
    lv_full = heads[:, F:]
    z = (mu_full + eps_ref[...].astype(jnp.float32) * jnp.exp(0.5 * lv_full)
         ).astype(jnp.bfloat16)

    # ----- decoder: 4 x (Linear + GELU) + final Linear -----
    h = z
    for i in range(4, 8):
        h = layer(h, i)
    out = jnp.dot(h, wm_ref[8], preferred_element_type=jnp.float32) + bm_ref[8]
    dec_ref[...] = out[:, :in_pad]


@functools.partial(jax.jit,
                   static_argnames=("batch", "real_in", "real_code", "tb"))
def vae_forward(x_pad, eps_pad, Wm, Bm, Wh, Bh, *,
                batch, real_in, real_code, tb):
    Bp = x_pad.shape[0]
    assert Bp % tb == 0
    in_pad = _round8(real_in)
    code_pad = _round8(real_code)
    grid = (Bp // tb,)

    def row_spec(w):
        return pl.BlockSpec((tb, w), lambda i: (i, 0))

    # Weights/biases are grid-constant; the auto-pipeline keeps them resident
    # (~0.4 MiB even double-buffered — negligible vs any VMEM limit).
    wm_spec = pl.BlockSpec((N_MAIN, F, F), lambda i: (0, 0, 0))
    bm_spec = pl.BlockSpec((N_MAIN, 1, F), lambda i: (0, 0, 0))
    wh_spec = pl.BlockSpec((F, 2 * F), lambda i: (0, 0))
    bh_spec = pl.BlockSpec((1, 2 * F), lambda i: (0, 0))

    dec, mu, lv = pl.pallas_call(
        functools.partial(vae_kernel, in_pad=in_pad, code_pad=code_pad),
        out_shape=(
            jax.ShapeDtypeStruct((Bp, in_pad), jnp.float32),
            jax.ShapeDtypeStruct((Bp, code_pad), jnp.float32),
            jax.ShapeDtypeStruct((Bp, code_pad), jnp.float32),
        ),
        grid_spec=pltpu.PrefetchScalarGridSpec(
            num_scalar_prefetch=0,
            grid=grid,
            in_specs=[row_spec(F), row_spec(F),
                      wm_spec, bm_spec, wh_spec, bh_spec],
            out_specs=[row_spec(in_pad), row_spec(code_pad),
                       row_spec(code_pad)],
        ),
        compiler_params=pltpu.CompilerParams(
            dimension_semantics=("parallel",)),
    )(x_pad, eps_pad, Wm, Bm, Wh, Bh)
    # slice padded batch rows and padded feature lanes
    return (dec[:batch, :real_in],
            mu[:batch, :real_code],
            lv[:batch, :real_code])


def choose_tiling(batch, tb_cap=TB_CAP):
    """Pick (batch tile, padded batch). Pads the batch only up to the next
    sublane multiple (<=8 wasted rows for split batches) and, when split into
    multiple grid steps, keeps the step count even so v7x's two TensorCores
    load-balance."""
    bp8 = _round8(batch)
    if bp8 <= 2 * F:                 # small batch: a single tile
        return bp8, bp8
    steps = -(-bp8 // tb_cap)        # min steps fitting the cap
    if steps % 2:
        steps += 1                   # even step count (v7x: 2 TCs)
    tb = _round8(-(-bp8 // steps))
    return tb, steps * tb


def init_params(key, input_dim, h1, h2, h3, h4, code):
    """Deterministic torch.nn.Linear-style init (uniform +-1/sqrt(fan_in)),
    zero-padded into stacked (9,F,F) main weights, a fused (F,2F) mu|logvar
    head, and matching biases. Weights stored bf16, biases f32."""
    main_dims = [
        (input_dim, h1), (h1, h2), (h2, h3), (h3, h4),              # encoder
        (code, h4), (h4, h3), (h3, h2), (h2, h1), (h1, input_dim),  # decoder
    ]
    Wm = jnp.zeros((N_MAIN, F, F), jnp.float32)
    Bm = jnp.zeros((N_MAIN, 1, F), jnp.float32)
    for li, (fin, fout) in enumerate(main_dims):
        key, kw, kb = jax.random.split(key, 3)
        bound = 1.0 / math.sqrt(fin)
        w = jax.random.uniform(kw, (fin, fout), jnp.float32, -bound, bound)
        b = jax.random.uniform(kb, (fout,), jnp.float32, -bound, bound)
        Wm = Wm.at[li, :fin, :fout].set(w)
        Bm = Bm.at[li, 0, :fout].set(b)

    # fused mu (cols [:F]) and logvar (cols [F:]) heads, both h4 -> code
    Wh = jnp.zeros((F, 2 * F), jnp.float32)
    Bh = jnp.zeros((1, 2 * F), jnp.float32)
    bound = 1.0 / math.sqrt(h4)
    for hi in range(2):  # 0: mu, 1: logvar
        key, kw, kb = jax.random.split(key, 3)
        w = jax.random.uniform(kw, (h4, code), jnp.float32, -bound, bound)
        b = jax.random.uniform(kb, (code,), jnp.float32, -bound, bound)
        Wh = Wh.at[:h4, hi * F:hi * F + code].set(w)
        Bh = Bh.at[0, hi * F:hi * F + code].set(b)

    return Wm.astype(jnp.bfloat16), Bm, Wh.astype(jnp.bfloat16), Bh


def vae_reference(x_bf, eps_bf, Wm, Bm, Wh, Bh):
    """Plain-XLA reference using the kernel's exact numerics recipe (bf16
    weights/activations, f32 accumulation) — for self-checking only."""
    def lin(h, i):
        return jnp.dot(h, Wm[i], preferred_element_type=jnp.float32) + Bm[i]
    h = x_bf
    for i in range(4):
        h = _gelu(lin(h, i).astype(jnp.bfloat16))
    heads = jnp.dot(h, Wh, preferred_element_type=jnp.float32) + Bh
    mu, lv = heads[:, :F], heads[:, F:]
    z = (mu + eps_bf.astype(jnp.float32) * jnp.exp(0.5 * lv)
         ).astype(jnp.bfloat16)
    h = z
    for i in range(4, 8):
        h = _gelu(lin(h, i).astype(jnp.bfloat16))
    dec = lin(h, 8)
    return dec, mu, lv


if __name__ == "__main__":
    # module hyperparams (VAE.__init__ defaults; input_dim is a ctor argument)
    input_dim, h1, h2, h3, h4, code = 32, 128, 40, 10, 10, 2
    batch = 2

    key = jax.random.PRNGKey(0)
    key, kx, keps, kp = jax.random.split(key, 4)

    x = jax.random.normal(kx, (batch, input_dim), jnp.float32)
    eps = jax.random.normal(keps, (batch, code), jnp.float32)
    Wm, Bm, Wh, Bh = init_params(kp, input_dim, h1, h2, h3, h4, code)

    # pad batch (minimally) and features (to 128 lanes); x/eps go to HBM as
    # bf16 — both are consumed in bf16 inside the kernel anyway.
    tb, b_pad = choose_tiling(batch)
    x_pad = jnp.zeros((b_pad, F), jnp.bfloat16).at[:batch, :input_dim].set(
        x.astype(jnp.bfloat16))
    eps_pad = jnp.zeros((b_pad, F), jnp.bfloat16).at[:batch, :code].set(
        eps.astype(jnp.bfloat16))

    decoded, mu, logvar = vae_forward(
        x_pad, eps_pad, Wm, Bm, Wh, Bh,
        batch=batch, real_in=input_dim, real_code=code, tb=tb)
    jax.block_until_ready((decoded, mu, logvar))

    assert decoded.shape == (batch, input_dim)
    assert mu.shape == (batch, code)
    assert logvar.shape == (batch, code)

    # self-check against a plain-XLA reference with identical numerics
    dec_r, mu_r, lv_r = vae_reference(x_pad[:batch], eps_pad[:batch],
                                      Wm, Bm, Wh, Bh)
    assert bool(jnp.allclose(decoded, dec_r[:, :input_dim], atol=2e-2)), \
        "decoded mismatch"
    assert bool(jnp.allclose(mu, mu_r[:, :code], atol=2e-2)), "mu mismatch"
    assert bool(jnp.allclose(logvar, lv_r[:, :code], atol=2e-2)), \
        "logvar mismatch"

    print("KERNEL_OK")
</pallas_src>

<mosaic_0001>
module attributes {stable_mosaic.version = 11 : i64} {
  func.func @vae_kernel(%arg0: i32, %arg1: memref<8x128xbf16, #tpu.memory_space<vmem>>, %arg2: memref<8x128xbf16, #tpu.memory_space<vmem>>, %arg3: memref<9x128x128xbf16, #tpu.memory_space<vmem>>, %arg4: memref<9x1x128xf32, #tpu.memory_space<vmem>>, %arg5: memref<128x256xbf16, #tpu.memory_space<vmem>>, %arg6: memref<1x256xf32, #tpu.memory_space<vmem>>, %arg7: memref<8x32xf32, #tpu.memory_space<vmem>>, %arg8: memref<8x8xf32, #tpu.memory_space<vmem>>, %arg9: memref<8x8xf32, #tpu.memory_space<vmem>>) attributes {dimension_semantics = [#tpu.dimension_semantics<parallel>], iteration_bounds = array<i64: 1>, scalar_prefetch = 0 : i64, scratch_operands = 0 : i64, tpu.core_type = #tpu.core_type<tc>, window_params = [{transform_indices = @transform_0, window_bounds = array<i64: 8, 128>}, {transform_indices = @transform_1, window_bounds = array<i64: 8, 128>}, {pipeline_mode = #tpu.pipeline_mode<synchronous>, transform_indices = @transform_2, window_bounds = array<i64: 9, 128, 128>}, {pipeline_mode = #tpu.pipeline_mode<synchronous>, transform_indices = @transform_3, window_bounds = array<i64: 9, 1, 128>}, {pipeline_mode = #tpu.pipeline_mode<synchronous>, transform_indices = @transform_4, window_bounds = array<i64: 128, 256>}, {pipeline_mode = #tpu.pipeline_mode<synchronous>, transform_indices = @transform_5, window_bounds = array<i64: 1, 256>}, {transform_indices = @transform_6, window_bounds = array<i64: 8, 32>}, {transform_indices = @transform_7, window_bounds = array<i64: 8, 8>}, {transform_indices = @transform_8, window_bounds = array<i64: 8, 8>}]} {
    %c0 = arith.constant 0 : index
    %c0_0 = arith.constant 0 : index
    %0 = vector.load %arg1[%c0, %c0_0] : memref<8x128xbf16, #tpu.memory_space<vmem>>, vector<8x128xbf16>
    %c0_1 = arith.constant 0 : index
    %c0_2 = arith.constant 0 : index
    %c0_3 = arith.constant 0 : index
    %1 = vector.load %arg3[%c0_1, %c0_2, %c0_3] : memref<9x128x128xbf16, #tpu.memory_space<vmem>>, vector<1x128x128xbf16>
    %2 = vector.shape_cast %1 : vector<1x128x128xbf16> to vector<128x128xbf16>
    %cst = arith.constant dense<0.000000e+00> : vector<8x128xf32>
    %3 = tpu.matmul %0, %2, %cst {dimension_numbers = #tpu.dot_dimension_numbers<[1], [0], [0], [1], [0, 0, 1, 1], [], []>} : vector<8x128xbf16>, vector<128x128xbf16>, vector<8x128xf32> -> vector<8x128xf32>
    %c0_4 = arith.constant 0 : index
    %c0_5 = arith.constant 0 : index
    %c0_6 = arith.constant 0 : index
    %4 = vector.load %arg4[%c0_4, %c0_5, %c0_6] : memref<9x1x128xf32, #tpu.memory_space<vmem>>, vector<1x1x128xf32>
    %5 = vector.shape_cast %4 : vector<1x1x128xf32> to vector<1x128xf32>
    %6 = vector.broadcast %5 : vector<1x128xf32> to vector<8x128xf32>
    %7 = arith.addf %3, %6 : vector<8x128xf32>
    %8 = arith.truncf %7 : vector<8x128xf32> to vector<8x128xbf16>
    %9 = arith.mulf %8, %8 : vector<8x128xbf16>
    %10 = arith.mulf %8, %9 : vector<8x128xbf16>
    %cst_7 = arith.constant 4.467770e-02 : bf16
    %11 = vector.broadcast %cst_7 : bf16 to vector<8x128xbf16>
    %12 = arith.mulf %11, %10 : vector<8x128xbf16>
    %13 = arith.addf %8, %12 : vector<8x128xbf16>
    %cst_8 = arith.constant 7.968750e-01 : bf16
    %14 = vector.broadcast %cst_8 : bf16 to vector<8x128xbf16>
    %15 = arith.mulf %14, %13 : vector<8x128xbf16>
    %16 = math.tanh %15 : vector<8x128xbf16>
    %cst_9 = arith.constant 1.000000e+00 : bf16
    %17 = vector.broadcast %cst_9 : bf16 to vector<8x128xbf16>
    %18 = arith.addf %17, %16 : vector<8x128xbf16>
    %cst_10 = arith.constant 5.000000e-01 : bf16
    %19 = vector.broadcast %cst_10 : bf16 to vector<8x128xbf16>
    %20 = arith.mulf %19, %18 : vector<8x128xbf16>
    %21 = arith.mulf %8, %20 : vector<8x128xbf16>
    %c1 = arith.constant 1 : index
    %c0_11 = arith.constant 0 : index
    %c0_12 = arith.constant 0 : index
    %22 = vector.load %arg3[%c1, %c0_11, %c0_12] : memref<9x128x128xbf16, #tpu.memory_space<vmem>>, vector<1x128x128xbf16>
    %23 = vector.shape_cast %22 : vector<1x128x128xbf16> to vector<128x128xbf16>
    %cst_13 = arith.constant dense<0.000000e+00> : vector<8x128xf32>
    %24 = tpu.matmul %21, %23, %cst_13 {dimension_numbers = #tpu.dot_dimension_numbers<[1], [0], [0], [1], [0, 0, 1, 1], [], []>} : vector<8x128xbf16>, vector<128x128xbf16>, vector<8x128xf32> -> vector<8x128xf32>
    %c1_14 = arith.constant 1 : index
    %c0_15 = arith.constant 0 : index
    %c0_16 = arith.constant 0 : index
    %25 = vector.load %arg4[%c1_14, %c0_15, %c0_16] : memref<9x1x128xf32, #tpu.memory_space<vmem>>, vector<1x1x128xf32>
    %26 = vector.shape_cast %25 : vector<1x1x128xf32> to vector<1x128xf32>
    %27 = vector.broadcast %26 : vector<1x128xf32> to vector<8x128xf32>
    %28 = arith.addf %24, %27 : vector<8x128xf32>
    %29 = arith.truncf %28 : vector<8x128xf32> to vector<8x128xbf16>
    %30 = arith.mulf %29, %29 : vector<8x128xbf16>
    %31 = arith.mulf %29, %30 : vector<8x128xbf16>
    %cst_17 = arith.constant 4.467770e-02 : bf16
    %32 = vector.broadcast %cst_17 : bf16 to vector<8x128xbf16>
    %33 = arith.mulf %32, %31 : vector<8x128xbf16>
    %34 = arith.addf %29, %33 : vector<8x128xbf16>
    %cst_18 = arith.constant 7.968750e-01 : bf16
    %35 = vector.broadcast %cst_18 : bf16 to vector<8x128xbf16>
    %36 = arith.mulf %35, %34 : vector<8x128xbf16>
    %37 = math.tanh %36 : vector<8x128xbf16>
    %cst_19 = arith.constant 1.000000e+00 : bf16
    %38 = vector.broadcast %cst_19 : bf16 to vector<8x128xbf16>
    %39 = arith.addf %38, %37 : vector<8x128xbf16>
    %cst_20 = arith.constant 5.000000e-01 : bf16
    %40 = vector.broadcast %cst_20 : bf16 to vector<8x128xbf16>
    %41 = arith.mulf %40, %39 : vector<8x128xbf16>
    %42 = arith.mulf %29, %41 : vector<8x128xbf16>
    %c2 = arith.constant 2 : index
    %c0_21 = arith.constant 0 : index
    %c0_22 = arith.constant 0 : index
    %43 = vector.load %arg3[%c2, %c0_21, %c0_22] : memref<9x128x128xbf16, #tpu.memory_space<vmem>>, vector<1x128x128xbf16>
    %44 = vector.shape_cast %43 : vector<1x128x128xbf16> to vector<128x128xbf16>
    %cst_23 = arith.constant dense<0.000000e+00> : vector<8x128xf32>
    %45 = tpu.matmul %42, %44, %cst_23 {dimension_numbers = #tpu.dot_dimension_numbers<[1], [0], [0], [1], [0, 0, 1, 1], [], []>} : vector<8x128xbf16>, vector<128x128xbf16>, vector<8x128xf32> -> vector<8x128xf32>
    %c2_24 = arith.constant 2 : index
    %c0_25 = arith.constant 0 : index
    %c0_26 = arith.constant 0 : index
    %46 = vector.load %arg4[%c2_24, %c0_25, %c0_26] : memref<9x1x128xf32, #tpu.memory_space<vmem>>, vector<1x1x128xf32>
    %47 = vector.shape_cast %46 : vector<1x1x128xf32> to vector<1x128xf32>
    %48 = vector.broadcast %47 : vector<1x128xf32> to vector<8x128xf32>
    %49 = arith.addf %45, %48 : vector<8x128xf32>
    %50 = arith.truncf %49 : vector<8x128xf32> to vector<8x128xbf16>
    %51 = arith.mulf %50, %50 : vector<8x128xbf16>
    %52 = arith.mulf %50, %51 : vector<8x128xbf16>
    %cst_27 = arith.constant 4.467770e-02 : bf16
    %53 = vector.broadcast %cst_27 : bf16 to vector<8x128xbf16>
    %54 = arith.mulf %53, %52 : vector<8x128xbf16>
    %55 = arith.addf %50, %54 : vector<8x128xbf16>
    %cst_28 = arith.constant 7.968750e-01 : bf16
    %56 = vector.broadcast %cst_28 : bf16 to vector<8x128xbf16>
    %57 = arith.mulf %56, %55 : vector<8x128xbf16>
    %58 = math.tanh %57 : vector<8x128xbf16>
    %cst_29 = arith.constant 1.000000e+00 : bf16
    %59 = vector.broadcast %cst_29 : bf16 to vector<8x128xbf16>
    %60 = arith.addf %59, %58 : vector<8x128xbf16>
    %cst_30 = arith.constant 5.000000e-01 : bf16
    %61 = vector.broadcast %cst_30 : bf16 to vector<8x128xbf16>
    %62 = arith.mulf %61, %60 : vector<8x128xbf16>
    %63 = arith.mulf %50, %62 : vector<8x128xbf16>
    %c3 = arith.constant 3 : index
    %c0_31 = arith.constant 0 : index
    %c0_32 = arith.constant 0 : index
    %64 = vector.load %arg3[%c3, %c0_31, %c0_32] : memref<9x128x128xbf16, #tpu.memory_space<vmem>>, vector<1x128x128xbf16>
    %65 = vector.shape_cast %64 : vector<1x128x128xbf16> to vector<128x128xbf16>
    %cst_33 = arith.constant dense<0.000000e+00> : vector<8x128xf32>
    %66 = tpu.matmul %63, %65, %cst_33 {dimension_numbers = #tpu.dot_dimension_numbers<[1], [0], [0], [1], [0, 0, 1, 1], [], []>} : vector<8x128xbf16>, vector<128x128xbf16>, vector<8x128xf32> -> vector<8x128xf32>
    %c3_34 = arith.constant 3 : index
    %c0_35 = arith.constant 0 : index
    %c0_36 = arith.constant 0 : index
    %67 = vector.load %arg4[%c3_34, %c0_35, %c0_36] : memref<9x1x128xf32, #tpu.memory_space<vmem>>, vector<1x1x128xf32>
    %68 = vector.shape_cast %67 : vector<1x1x128xf32> to vector<1x128xf32>
    %69 = vector.broadcast %68 : vector<1x128xf32> to vector<8x128xf32>
    %70 = arith.addf %66, %69 : vector<8x128xf32>
    %71 = arith.truncf %70 : vector<8x128xf32> to vector<8x128xbf16>
    %72 = arith.mulf %71, %71 : vector<8x128xbf16>
    %73 = arith.mulf %71, %72 : vector<8x128xbf16>
    %cst_37 = arith.constant 4.467770e-02 : bf16
    %74 = vector.broadcast %cst_37 : bf16 to vector<8x128xbf16>
    %75 = arith.mulf %74, %73 : vector<8x128xbf16>
    %76 = arith.addf %71, %75 : vector<8x128xbf16>
    %cst_38 = arith.constant 7.968750e-01 : bf16
    %77 = vector.broadcast %cst_38 : bf16 to vector<8x128xbf16>
    %78 = arith.mulf %77, %76 : vector<8x128xbf16>
    %79 = math.tanh %78 : vector<8x128xbf16>
    %cst_39 = arith.constant 1.000000e+00 : bf16
    %80 = vector.broadcast %cst_39 : bf16 to vector<8x128xbf16>
    %81 = arith.addf %80, %79 : vector<8x128xbf16>
    %cst_40 = arith.constant 5.000000e-01 : bf16
    %82 = vector.broadcast %cst_40 : bf16 to vector<8x128xbf16>
    %83 = arith.mulf %82, %81 : vector<8x128xbf16>
    %84 = arith.mulf %71, %83 : vector<8x128xbf16>
    %c0_41 = arith.constant 0 : index
    %c0_42 = arith.constant 0 : index
    %85 = vector.load %arg5[%c0_41, %c0_42] : memref<128x256xbf16, #tpu.memory_space<vmem>>, vector<128x256xbf16>
    %cst_43 = arith.constant dense<0.000000e+00> : vector<8x256xf32>
    %86 = tpu.matmul %84, %85, %cst_43 {dimension_numbers = #tpu.dot_dimension_numbers<[1], [0], [0], [1], [0, 0, 1, 1], [], []>} : vector<8x128xbf16>, vector<128x256xbf16>, vector<8x256xf32> -> vector<8x256xf32>
    %c0_44 = arith.constant 0 : index
    %c0_45 = arith.constant 0 : index
    %87 = vector.load %arg6[%c0_44, %c0_45] : memref<1x256xf32, #tpu.memory_space<vmem>>, vector<1x256xf32>
    %88 = vector.broadcast %87 : vector<1x256xf32> to vector<8x256xf32>
    %89 = arith.addf %86, %88 : vector<8x256xf32>
    %90 = vector.extract_strided_slice %89 {offsets = [0, 0], sizes = [8, 8], strides = [1, 1]} : vector<8x256xf32> to vector<8x8xf32>
    %c0_46 = arith.constant 0 : index
    %c0_47 = arith.constant 0 : index
    %91 = vector.load %arg8[%c0_46, %c0_47] : memref<8x8xf32, #tpu.memory_space<vmem>>, vector<8x8xf32>
    tpu.vector_store %arg8[%c0_46, %c0_47], %90 {strides = array<i32>} : memref<8x8xf32, #tpu.memory_space<vmem>>, vector<8x8xf32>,
    %92 = vector.extract_strided_slice %89 {offsets = [0, 128], sizes = [8, 8], strides = [1, 1]} : vector<8x256xf32> to vector<8x8xf32>
    %c0_48 = arith.constant 0 : index
    %c0_49 = arith.constant 0 : index
    %93 = vector.load %arg9[%c0_48, %c0_49] : memref<8x8xf32, #tpu.memory_space<vmem>>, vector<8x8xf32>
    tpu.vector_store %arg9[%c0_48, %c0_49], %92 {strides = array<i32>} : memref<8x8xf32, #tpu.memory_space<vmem>>, vector<8x8xf32>,
    %94 = vector.extract_strided_slice %89 {offsets = [0, 0], sizes = [8, 128], strides = [1, 1]} : vector<8x256xf32> to vector<8x128xf32>
    %95 = vector.extract_strided_slice %89 {offsets = [0, 128], sizes = [8, 128], strides = [1, 1]} : vector<8x256xf32> to vector<8x128xf32>
    %c0_50 = arith.constant 0 : index
    %c0_51 = arith.constant 0 : index
    %96 = vector.load %arg2[%c0_50, %c0_51] : memref<8x128xbf16, #tpu.memory_space<vmem>>, vector<8x128xbf16>
    %97 = arith.extf %96 : vector<8x128xbf16> to vector<8x128xf32>
    %cst_52 = arith.constant 5.000000e-01 : f32
    %98 = vector.broadcast %cst_52 : f32 to vector<8x128xf32>
    %99 = arith.mulf %98, %95 : vector<8x128xf32>
    %100 = math.exp %99 : vector<8x128xf32>
    %101 = arith.mulf %97, %100 : vector<8x128xf32>
    %102 = arith.addf %94, %101 : vector<8x128xf32>
    %103 = arith.truncf %102 : vector<8x128xf32> to vector<8x128xbf16>
    %c4 = arith.constant 4 : index
    %c0_53 = arith.constant 0 : index
    %c0_54 = arith.constant 0 : index
    %104 = vector.load %arg3[%c4, %c0_53, %c0_54] : memref<9x128x128xbf16, #tpu.memory_space<vmem>>, vector<1x128x128xbf16>
    %105 = vector.shape_cast %104 : vector<1x128x128xbf16> to vector<128x128xbf16>
    %cst_55 = arith.constant dense<0.000000e+00> : vector<8x128xf32>
    %106 = tpu.matmul %103, %105, %cst_55 {dimension_numbers = #tpu.dot_dimension_numbers<[1], [0], [0], [1], [0, 0, 1, 1], [], []>} : vector<8x128xbf16>, vector<128x128xbf16>, vector<8x128xf32> -> vector<8x128xf32>
    %c4_56 = arith.constant 4 : index
    %c0_57 = arith.constant 0 : index
    %c0_58 = arith.constant 0 : index
    %107 = vector.load %arg4[%c4_56, %c0_57, %c0_58] : memref<9x1x128xf32, #tpu.memory_space<vmem>>, vector<1x1x128xf32>
    %108 = vector.shape_cast %107 : vector<1x1x128xf32> to vector<1x128xf32>
    %109 = vector.broadcast %108 : vector<1x128xf32> to vector<8x128xf32>
    %110 = arith.addf %106, %109 : vector<8x128xf32>
    %111 = arith.truncf %110 : vector<8x128xf32> to vector<8x128xbf16>
    %112 = arith.mulf %111, %111 : vector<8x128xbf16>
    %113 = arith.mulf %111, %112 : vector<8x128xbf16>
    %cst_59 = arith.constant 4.467770e-02 : bf16
    %114 = vector.broadcast %cst_59 : bf16 to vector<8x128xbf16>
    %115 = arith.mulf %114, %113 : vector<8x128xbf16>
    %116 = arith.addf %111, %115 : vector<8x128xbf16>
    %cst_60 = arith.constant 7.968750e-01 : bf16
    %117 = vector.broadcast %cst_60 : bf16 to vector<8x128xbf16>
    %118 = arith.mulf %117, %116 : vector<8x128xbf16>
    %119 = math.tanh %118 : vector<8x128xbf16>
    %cst_61 = arith.constant 1.000000e+00 : bf16
    %120 = vector.broadcast %cst_61 : bf16 to vector<8x128xbf16>
    %121 = arith.addf %120, %119 : vector<8x128xbf16>
    %cst_62 = arith.constant 5.000000e-01 : bf16
    %122 = vector.broadcast %cst_62 : bf16 to vector<8x128xbf16>
    %123 = arith.mulf %122, %121 : vector<8x128xbf16>
    %124 = arith.mulf %111, %123 : vector<8x128xbf16>
    %c5 = arith.constant 5 : index
    %c0_63 = arith.constant 0 : index
    %c0_64 = arith.constant 0 : index
    %125 = vector.load %arg3[%c5, %c0_63, %c0_64] : memref<9x128x128xbf16, #tpu.memory_space<vmem>>, vector<1x128x128xbf16>
    %126 = vector.shape_cast %125 : vector<1x128x128xbf16> to vector<128x128xbf16>
    %cst_65 = arith.constant dense<0.000000e+00> : vector<8x128xf32>
    %127 = tpu.matmul %124, %126, %cst_65 {dimension_numbers = #tpu.dot_dimension_numbers<[1], [0], [0], [1], [0, 0, 1, 1], [], []>} : vector<8x128xbf16>, vector<128x128xbf16>, vector<8x128xf32> -> vector<8x128xf32>
    %c5_66 = arith.constant 5 : index
    %c0_67 = arith.constant 0 : index
    %c0_68 = arith.constant 0 : index
    %128 = vector.load %arg4[%c5_66, %c0_67, %c0_68] : memref<9x1x128xf32, #tpu.memory_space<vmem>>, vector<1x1x128xf32>
    %129 = vector.shape_cast %128 : vector<1x1x128xf32> to vector<1x128xf32>
    %130 = vector.broadcast %129 : vector<1x128xf32> to vector<8x128xf32>
    %131 = arith.addf %127, %130 : vector<8x128xf32>
    %132 = arith.truncf %131 : vector<8x128xf32> to vector<8x128xbf16>
    %133 = arith.mulf %132, %132 : vector<8x128xbf16>
    %134 = arith.mulf %132, %133 : vector<8x128xbf16>
    %cst_69 = arith.constant 4.467770e-02 : bf16
    %135 = vector.broadcast %cst_69 : bf16 to vector<8x128xbf16>
    %136 = arith.mulf %135, %134 : vector<8x128xbf16>
    %137 = arith.addf %132, %136 : vector<8x128xbf16>
    %cst_70 = arith.constant 7.968750e-01 : bf16
    %138 = vector.broadcast %cst_70 : bf16 to vector<8x128xbf16>
    %139 = arith.mulf %138, %137 : vector<8x128xbf16>
    %140 = math.tanh %139 : vector<8x128xbf16>
    %cst_71 = arith.constant 1.000000e+00 : bf16
    %141 = vector.broadcast %cst_71 : bf16 to vector<8x128xbf16>
    %142 = arith.addf %141, %140 : vector<8x128xbf16>
    %cst_72 = arith.constant 5.000000e-01 : bf16
    %143 = vector.broadcast %cst_72 : bf16 to vector<8x128xbf16>
    %144 = arith.mulf %143, %142 : vector<8x128xbf16>
    %145 = arith.mulf %132, %144 : vector<8x128xbf16>
    %c6 = arith.constant 6 : index
    %c0_73 = arith.constant 0 : index
    %c0_74 = arith.constant 0 : index
    %146 = vector.load %arg3[%c6, %c0_73, %c0_74] : memref<9x128x128xbf16, #tpu.memory_space<vmem>>, vector<1x128x128xbf16>
    %147 = vector.shape_cast %146 : vector<1x128x128xbf16> to vector<128x128xbf16>
    %cst_75 = arith.constant dense<0.000000e+00> : vector<8x128xf32>
    %148 = tpu.matmul %145, %147, %cst_75 {dimension_numbers = #tpu.dot_dimension_numbers<[1], [0], [0], [1], [0, 0, 1, 1], [], []>} : vector<8x128xbf16>, vector<128x128xbf16>, vector<8x128xf32> -> vector<8x128xf32>
    %c6_76 = arith.constant 6 : index
    %c0_77 = arith.constant 0 : index
    %c0_78 = arith.constant 0 : index
    %149 = vector.load %arg4[%c6_76, %c0_77, %c0_78] : memref<9x1x128xf32, #tpu.memory_space<vmem>>, vector<1x1x128xf32>
    %150 = vector.shape_cast %149 : vector<1x1x128xf32> to vector<1x128xf32>
    %151 = vector.broadcast %150 : vector<1x128xf32> to vector<8x128xf32>
    %152 = arith.addf %148, %151 : vector<8x128xf32>
    %153 = arith.truncf %152 : vector<8x128xf32> to vector<8x128xbf16>
    %154 = arith.mulf %153, %153 : vector<8x128xbf16>
    %155 = arith.mulf %153, %154 : vector<8x128xbf16>
    %cst_79 = arith.constant 4.467770e-02 : bf16
    %156 = vector.broadcast %cst_79 : bf16 to vector<8x128xbf16>
    %157 = arith.mulf %156, %155 : vector<8x128xbf16>
    %158 = arith.addf %153, %157 : vector<8x128xbf16>
    %cst_80 = arith.constant 7.968750e-01 : bf16
    %159 = vector.broadcast %cst_80 : bf16 to vector<8x128xbf16>
    %160 = arith.mulf %159, %158 : vector<8x128xbf16>
    %161 = math.tanh %160 : vector<8x128xbf16>
    %cst_81 = arith.constant 1.000000e+00 : bf16
    %162 = vector.broadcast %cst_81 : bf16 to vector<8x128xbf16>
    %163 = arith.addf %162, %161 : vector<8x128xbf16>
    %cst_82 = arith.constant 5.000000e-01 : bf16
    %164 = vector.broadcast %cst_82 : bf16 to vector<8x128xbf16>
    %165 = arith.mulf %164, %163 : vector<8x128xbf16>
    %166 = arith.mulf %153, %165 : vector<8x128xbf16>
    %c7 = arith.constant 7 : index
    %c0_83 = arith.constant 0 : index
    %c0_84 = arith.constant 0 : index
    %167 = vector.load %arg3[%c7, %c0_83, %c0_84] : memref<9x128x128xbf16, #tpu.memory_space<vmem>>, vector<1x128x128xbf16>
    %168 = vector.shape_cast %167 : vector<1x128x128xbf16> to vector<128x128xbf16>
    %cst_85 = arith.constant dense<0.000000e+00> : vector<8x128xf32>
    %169 = tpu.matmul %166, %168, %cst_85 {dimension_numbers = #tpu.dot_dimension_numbers<[1], [0], [0], [1], [0, 0, 1, 1], [], []>} : vector<8x128xbf16>, vector<128x128xbf16>, vector<8x128xf32> -> vector<8x128xf32>
    %c7_86 = arith.constant 7 : index
    %c0_87 = arith.constant 0 : index
    %c0_88 = arith.constant 0 : index
    %170 = vector.load %arg4[%c7_86, %c0_87, %c0_88] : memref<9x1x128xf32, #tpu.memory_space<vmem>>, vector<1x1x128xf32>
    %171 = vector.shape_cast %170 : vector<1x1x128xf32> to vector<1x128xf32>
    %172 = vector.broadcast %171 : vector<1x128xf32> to vector<8x128xf32>
    %173 = arith.addf %169, %172 : vector<8x128xf32>
    %174 = arith.truncf %173 : vector<8x128xf32> to vector<8x128xbf16>
    %175 = arith.mulf %174, %174 : vector<8x128xbf16>
    %176 = arith.mulf %174, %175 : vector<8x128xbf16>
    %cst_89 = arith.constant 4.467770e-02 : bf16
    %177 = vector.broadcast %cst_89 : bf16 to vector<8x128xbf16>
    %178 = arith.mulf %177, %176 : vector<8x128xbf16>
    %179 = arith.addf %174, %178 : vector<8x128xbf16>
    %cst_90 = arith.constant 7.968750e-01 : bf16
    %180 = vector.broadcast %cst_90 : bf16 to vector<8x128xbf16>
    %181 = arith.mulf %180, %179 : vector<8x128xbf16>
    %182 = math.tanh %181 : vector<8x128xbf16>
    %cst_91 = arith.constant 1.000000e+00 : bf16
    %183 = vector.broadcast %cst_91 : bf16 to vector<8x128xbf16>
    %184 = arith.addf %183, %182 : vector<8x128xbf16>
    %cst_92 = arith.constant 5.000000e-01 : bf16
    %185 = vector.broadcast %cst_92 : bf16 to vector<8x128xbf16>
    %186 = arith.mulf %185, %184 : vector<8x128xbf16>
    %187 = arith.mulf %174, %186 : vector<8x128xbf16>
    %c8 = arith.constant 8 : index
    %c0_93 = arith.constant 0 : index
    %c0_94 = arith.constant 0 : index
    %188 = vector.load %arg3[%c8, %c0_93, %c0_94] : memref<9x128x128xbf16, #tpu.memory_space<vmem>>, vector<1x128x128xbf16>
    %189 = vector.shape_cast %188 : vector<1x128x128xbf16> to vector<128x128xbf16>
    %cst_95 = arith.constant dense<0.000000e+00> : vector<8x128xf32>
    %190 = tpu.matmul %187, %189, %cst_95 {dimension_numbers = #tpu.dot_dimension_numbers<[1], [0], [0], [1], [0, 0, 1, 1], [], []>} : vector<8x128xbf16>, vector<128x128xbf16>, vector<8x128xf32> -> vector<8x128xf32>
    %c8_96 = arith.constant 8 : index
    %c0_97 = arith.constant 0 : index
    %c0_98 = arith.constant 0 : index
    %191 = vector.load %arg4[%c8_96, %c0_97, %c0_98] : memref<9x1x128xf32, #tpu.memory_space<vmem>>, vector<1x1x128xf32>
    %192 = vector.shape_cast %191 : vector<1x1x128xf32> to vector<1x128xf32>
    %193 = vector.broadcast %192 : vector<1x128xf32> to vector<8x128xf32>
    %194 = arith.addf %190, %193 : vector<8x128xf32>
    %195 = vector.extract_strided_slice %194 {offsets = [0, 0], sizes = [8, 32], strides = [1, 1]} : vector<8x128xf32> to vector<8x32xf32>
    %c0_99 = arith.constant 0 : index
    %c0_100 = arith.constant 0 : index
    %196 = vector.load %arg7[%c0_99, %c0_100] : memref<8x32xf32, #tpu.memory_space<vmem>>, vector<8x32xf32>
    tpu.vector_store %arg7[%c0_99, %c0_100], %195 {strides = array<i32>} : memref<8x32xf32, #tpu.memory_space<vmem>>, vector<8x32xf32>,
    return
  }
  func.func @transform_0(%arg0: i32) -> (i32, i32) {
    %c0_i32 = arith.constant 0 : i32
    %c0_i32_0 = arith.constant 0 : i32
    return %arg0, %c0_i32 : i32, i32
  }
  func.func @transform_1(%arg0: i32) -> (i32, i32) {
    %c0_i32 = arith.constant 0 : i32
    %c0_i32_0 = arith.constant 0 : i32
    return %arg0, %c0_i32 : i32, i32
  }
  func.func @transform_2(%arg0: i32) -> (i32, i32, i32) {
    %c0_i32 = arith.constant 0 : i32
    %c0_i32_0 = arith.constant 0 : i32
    %c0_i32_1 = arith.constant 0 : i32
    %c0_i32_2 = arith.constant 0 : i32
    return %c0_i32, %c0_i32_0, %c0_i32_1 : i32, i32, i32
  }
  func.func @transform_3(%arg0: i32) -> (i32, i32, i32) {
    %c0_i32 = arith.constant 0 : i32
    %c0_i32_0 = arith.constant 0 : i32
    %c0_i32_1 = arith.constant 0 : i32
    %c0_i32_2 = arith.constant 0 : i32
    return %c0_i32, %c0_i32_0, %c0_i32_1 : i32, i32, i32
  }
  func.func @transform_4(%arg0: i32) -> (i32, i32) {
    %c0_i32 = arith.constant 0 : i32
    %c0_i32_0 = arith.constant 0 : i32
    %c0_i32_1 = arith.constant 0 : i32
    return %c0_i32, %c0_i32_0 : i32, i32
  }
  func.func @transform_5(%arg0: i32) -> (i32, i32) {
    %c0_i32 = arith.constant 0 : i32
    %c0_i32_0 = arith.constant 0 : i32
    %c0_i32_1 = arith.constant 0 : i32
    return %c0_i32, %c0_i32_0 : i32, i32
  }
  func.func @transform_6(%arg0: i32) -> (i32, i32) {
    %c0_i32 = arith.constant 0 : i32
    %c0_i32_0 = arith.constant 0 : i32
    return %arg0, %c0_i32 : i32, i32
  }
  func.func @transform_7(%arg0: i32) -> (i32, i32) {
    %c0_i32 = arith.constant 0 : i32
    %c0_i32_0 = arith.constant 0 : i32
    return %arg0, %c0_i32 : i32, i32
  }
  func.func @transform_8(%arg0: i32) -> (i32, i32) {
    %c0_i32 = arith.constant 0 : i32
    %c0_i32_0 = arith.constant 0 : i32
    return %arg0, %c0_i32 : i32, i32
  }
}

</mosaic_0001>

<llo_original>
// kernel: vae_forward.1
$region0: #{vae_forward.1}
  #allocation0 [shape = 'u32[]', space=smem, size = 0x4, offset = 0x4, fixed_abs, tag = 'smem constant byte address 0x4 - core index']
  #allocation1 [shape = 'u32[144,128]{1,0:T(1,128)}', space=vmem, size = 0x12000, scoped, tag = 'internal scratch']
  %s0 = inlined_call_operand.hbm [shape: bf16[8,128], index: 0, kind: input, shape index: {}]
  %s1 = inlined_call_operand.hbm [shape: bf16[8,128], index: 1, kind: input, shape index: {}]
  %s2 = inlined_call_operand.hbm [shape: bf16[9,128,128], index: 2, kind: input, shape index: {}]
  %s3 = inlined_call_operand.vmem [shape: f32[9,1,128], index: 3, kind: input, shape index: {}]
  %s4 = inlined_call_operand.hbm [shape: bf16[128,256], index: 4, kind: input, shape index: {}]
  %s5 = inlined_call_operand.vmem [shape: f32[1,256], index: 5, kind: input, shape index: {}]
  %s6 = inlined_call_operand.vmem [shape: f32[8,32], index: 6, kind: output, shape index: {0}]
  %s7 = inlined_call_operand.vmem [shape: f32[8,8], index: 7, kind: output, shape index: {1}]
  %s8 = inlined_call_operand.vmem [shape: f32[8,8], index: 8, kind: output, shape index: {2}]
  %9 = xla_tuple %s6, %s7, %s8
  %s10 = sld [smem:[#allocation0]]
  $region66: #{vae_forward.1} parent=0
    _
  %s12 = ssub.s32 1, %s10
  %s13 = scalar_select 0, %s12, %s10
  $region1: #{vae_forward.1} parent=0
    #allocation2 [shape = 'u8[2048]{0}', space=vmem, size = 0x800, scoped, tag = 'input window, operand 0, single buffered']
    #allocation3 [shape = 's32[1]{0}', space=sflag, size = 0x4, scoped, tag = 'scoped memory for vae_forward.1']
    #allocation4 [shape = 'u8[2048]{0}', space=vmem, size = 0x800, scoped, tag = 'input window, operand 1, single buffered']
    #allocation5 [shape = 's32[1]{0}', space=sflag, size = 0x4, scoped, tag = 'scoped memory for vae_forward.1']
    #allocation6 [shape = 'u8[294912]{0}', space=vmem, size = 0x48000, scoped, tag = 'input window, operand 2, single buffered']
    #allocation7 [shape = 'u8[65536]{0}', space=vmem, size = 0x10000, scoped, tag = 'input window, operand 4, single buffered']
    #allocation8 [shape = 's32[1]{0}', space=sflag, size = 0x4, scoped, tag = 'scoped memory for vae_forward.1']
    %14 = vsyncpa [#allocation3], 0
    %15 = vsyncpa [#allocation5], 0
    %16 = vsyncpa [#allocation8], 0
    // Predicated region
    $region2: #{vae_forward.1} parent=1 // pred_check
      _
    $region3: #{vae_forward.1} parent=1 // pred_check_branch
      %18 = sbr.rel (0) target = $region5
    $region4: #{vae_forward.1} parent=1 // pred_region
      %s20 = ssub.s32 64, 64
      %21 = vsyncadd [#allocation3], %s20
      %s23 = sshll.u32 [#allocation2], 4
      %s24 = int_to_ptr.vmem [resolvable:$true] %s23
      %26 = dma.hbm_to_vmem [thread:$0]  %s0, 64, %s24, [#allocation3]
    $region5: #{vae_forward.1} parent=1 // pred_fallthru
      _
    // Predicated region
    $region6: #{vae_forward.1} parent=1 // pred_check
      _
    $region7: #{vae_forward.1} parent=1 // pred_check_branch
      %28 = sbr.rel (0) target = $region9
    $region8: #{vae_forward.1} parent=1 // pred_region
      %s30 = ssub.s32 64, 64
      %31 = vsyncadd [#allocation5], %s30
      %s33 = sshll.u32 [#allocation4], 4
      %s34 = int_to_ptr.vmem [resolvable:$true] %s33
      %36 = dma.hbm_to_vmem [thread:$0]  %s1, 64, %s34, [#allocation5]
    $region9: #{vae_forward.1} parent=1 // pred_fallthru
      _
    // Predicated region
    $region10: #{vae_forward.1} parent=1 // pred_check
      _
    $region11: #{vae_forward.1} parent=1 // pred_check_branch
      %38 = sbr.rel (0) target = $region13
    $region12: #{vae_forward.1} parent=1 // pred_region
      %s40 = ssub.s32 9216, 9216
      %41 = vsyncadd [#allocation5], %s40
      %s42 = sshll.u32 [#allocation6], 4
      %s43 = int_to_ptr.vmem [resolvable:$true] %s42
      %48 = dma.hbm_to_vmem [thread:$0]  %s2, 9216, %s43, [#allocation5], 64, 64, 4
    $region13: #{vae_forward.1} parent=1 // pred_fallthru
      _
    // Predicated region
    $region14: #{vae_forward.1} parent=1 // pred_check
      _
    $region15: #{vae_forward.1} parent=1 // pred_check_branch
      %50 = sbr.rel (0) target = $region17
    $region16: #{vae_forward.1} parent=1 // pred_region
      _
    $region17: #{vae_forward.1} parent=1 // pred_fallthru
      _
    // Predicated region
    $region18: #{vae_forward.1} parent=1 // pred_check
      _
    $region19: #{vae_forward.1} parent=1 // pred_check_branch
      %52 = sbr.rel (0) target = $region21
    $region20: #{vae_forward.1} parent=1 // pred_region
      %s54 = ssub.s32 2048, 2048
      %55 = vsyncadd [#allocation8], %s54
      %s56 = sshll.u32 [#allocation7], 4
      %s57 = int_to_ptr.vmem [resolvable:$true] %s56
      %62 = dma.hbm_to_vmem [thread:$0]  %s4, 2048, %s57, [#allocation8], 128, 128, 8
    $region21: #{vae_forward.1} parent=1 // pred_fallthru
      _
    // Predicated region
    $region22: #{vae_forward.1} parent=1 // pred_check
      _
    $region23: #{vae_forward.1} parent=1 // pred_check_branch
      %64 = sbr.rel (0) target = $region25
    $region24: #{vae_forward.1} parent=1 // pred_region
      _
    $region25: #{vae_forward.1} parent=1 // pred_fallthru
      _
    // Predicated region
    $region26: #{vae_forward.1} parent=1 // pred_check
      _
    $region27: #{vae_forward.1} parent=1 // pred_check_branch
      %66 = sbr.rel (0) target = $region29
    $region28: #{vae_forward.1} parent=1 // pred_region
      %67 = dma.done [#allocation3], 64
    $region29: #{vae_forward.1} parent=1 // pred_fallthru
      _
    // Predicated region
    $region30: #{vae_forward.1} parent=1 // pred_check
      _
    $region31: #{vae_forward.1} parent=1 // pred_check_branch
      %69 = sbr.rel (0) target = $region33
    $region32: #{vae_forward.1} parent=1 // pred_region
      %70 = dma.done [#allocation5], 64
    $region33: #{vae_forward.1} parent=1 // pred_fallthru
      _
    // Predicated region
    $region34: #{vae_forward.1} parent=1 // pred_check
      _
    $region35: #{vae_forward.1} parent=1 // pred_check_branch
      %72 = sbr.rel (0) target = $region37
    $region36: #{vae_forward.1} parent=1 // pred_region
      %73 = dma.done [#allocation5], 9216
    $region37: #{vae_forward.1} parent=1 // pred_fallthru
      _
    // Predicated region
    $region38: #{vae_forward.1} parent=1 // pred_check
      _
    $region39: #{vae_forward.1} parent=1 // pred_check_branch
      %75 = sbr.rel (0) target = $region41
    $region40: #{vae_forward.1} parent=1 // pred_region
      %76 = dma.done [#allocation8], 2048
    $region41: #{vae_forward.1} parent=1 // pred_fallthru
      _
    %v82 = vld [vmem:[#allocation2] sm:$0xf]
    %v83 = vld [vmem:[#allocation6] sm:$0xf]
    %v84 = vld [vmem:[#allocation6 + $0x4] sm:$0xf]
    %v85 = vld [vmem:[#allocation6 + $0x8] sm:$0xf]
    %v86 = vld [vmem:[#allocation6 + $0xc] sm:$0xf]
    %v87 = vld [vmem:[#allocation6 + $0x10] sm:$0xf]
    %v88 = vld [vmem:[#allocation6 + $0x14] sm:$0xf]
    %v89 = vld [vmem:[#allocation6 + $0x18] sm:$0xf]
    %v90 = vld [vmem:[#allocation6 + $0x1c] sm:$0xf]
    %v91 = vld [vmem:[#allocation6 + $0x20] sm:$0xf]
    %v92 = vld [vmem:[#allocation6 + $0x24] sm:$0xf]
    %v93 = vld [vmem:[#allocation6 + $0x28] sm:$0xf]
    %v94 = vld [vmem:[#allocation6 + $0x2c] sm:$0xf]
    %v95 = vld [vmem:[#allocation6 + $0x30] sm:$0xf]
    %v96 = vld [vmem:[#allocation6 + $0x34] sm:$0xf]
    %v97 = vld [vmem:[#allocation6 + $0x38] sm:$0xf]
    %v98 = vld [vmem:[#allocation6 + $0x3c] sm:$0xf]
    %v99 = vld [vmem:[%s3] sm:$0x1]
    %v101 = vlaneseq
    %v102 = vshrl.u32 %v101, 7
    %v103 = vsub.s32 0, %v102
    %v104 = vrot.slane %v99, %v103
    %v122 = vunpack.c.l.b16 %v83
    %v123 = vunpack.c.l.b16 %v84
    %v124 = vunpack.c.l.b16 %v85
    %v125 = vunpack.c.l.b16 %v86
    %v126 = vunpack.c.l.b16 %v87
    %v127 = vunpack.c.l.b16 %v88
    %v128 = vunpack.c.l.b16 %v89
    %v129 = vunpack.c.l.b16 %v90
    %v130 = vunpack.c.l.b16 %v91
    %v131 = vunpack.c.l.b16 %v92
    %v132 = vunpack.c.l.b16 %v93
    %v133 = vunpack.c.l.b16 %v94
    %v134 = vunpack.c.l.b16 %v95
    %v135 = vunpack.c.l.b16 %v96
    %v136 = vunpack.c.l.b16 %v97
    %v137 = vunpack.c.l.b16 %v98
    %v138 = vpack.c.b16 %v123, %v122
    %v139 = vpack.c.b16 %v125, %v124
    %v140 = vpack.c.b16 %v127, %v126
    %v141 = vpack.c.b16 %v129, %v128
    %v142 = vpack.c.b16 %v131, %v130
    %v143 = vpack.c.b16 %v133, %v132
    %v144 = vpack.c.b16 %v135, %v134
    %v145 = vpack.c.b16 %v137, %v136
    %154 = vmatprep.subr.bf16.mxu0 0
    %155 = vmatpush1.bf16.msra.mxu0 %v138
    %156 = vmatprep.subr.bf16.mxu0 0
    %157 = vmatpush1.bf16.msra.mxu0 %v139
    %158 = vmatprep.subr.bf16.mxu0 0
    %159 = vmatpush1.bf16.msra.mxu0 %v140
    %160 = vmatprep.subr.bf16.mxu0 0
    %161 = vmatpush1.bf16.msra.mxu0 %v141
    %162 = vmatprep.subr.bf16.mxu0 0
    %163 = vmatpush1.bf16.msra.mxu0 %v142
    %164 = vmatprep.subr.bf16.mxu0 0
    %165 = vmatpush1.bf16.msra.mxu0 %v143
    %166 = vmatprep.subr.bf16.mxu0 0
    %167 = vmatpush1.bf16.msra.mxu0 %v144
    %168 = vmatprep.subr.bf16.mxu0 0
    %169 = vmatpush1.bf16.msra.mxu0 %v145
    %170 = vmatprep.subr.bf16.mxu0 0
    %171 = vmatpush1.bf16.msra.mxu0 0
    %172 = vmatprep.subr.bf16.mxu0 0
    %173 = vmatpush1.bf16.msra.mxu0 0
    %174 = vmatprep.subr.bf16.mxu0 0
    %175 = vmatpush1.bf16.msra.mxu0 0
    %176 = vmatprep.subr.bf16.mxu0 0
    %177 = vmatpush1.bf16.msra.mxu0 0
    %178 = vmatprep.subr.bf16.mxu0 0
    %179 = vmatpush1.bf16.msra.mxu0 0
    %180 = vmatprep.subr.bf16.mxu0 0
    %181 = vmatpush1.bf16.msra.mxu0 0
    %182 = vmatprep.subr.bf16.mxu0 0
    %183 = vmatpush1.bf16.msra.mxu0 0
    %184 = vmatprep.subr.bf16.mxu0 0
    %185 = vmatpush1.bf16.msra.mxu0 0
    %186 = vmatprep.mubr.bf16.mxu0 0
    %187 = vmatmul.mubr.bf16.gmra.mrb[0].mxu0 %v82
    %v188 = vpop.f32.mrb[0].mxu0
    %v189 = vadd.f32 %v104, %v188
    %v190 = vpop.f32.mrb[0].mxu0
    %v191 = vpop.f32.mrb[0].mxu0
    %v192 = vpop.f32.mrb[0].mxu0
    %193 = vdwg.mxu0
    %v194 = vpack.c.bf16 %v189, %v189
    %v195 = vmul.bf16 %v194, %v194
    %v196 = vmul.bf16 %v194, %v195
    %v197 = vmul.bf16 %v196, 1027030327
    %v198 = vadd.bf16 %v194, %v197
    %v199 = vmul.bf16 %v198, 1061961548
    %v200 = vtanh.bf16.pop %v199
    %v201 = vadd.bf16 %v200, 1065369472
    %v202 = vmul.bf16 %v201, 1056980736
    %v203 = vmul.bf16 %v194, %v202
    %s204 = scalar_lea.vmem [#allocation6], 64
    %v205 = vld [vmem:[%s204] sm:$0xf]
    %v206 = vld [vmem:[%s204 + $0x4] sm:$0xf]
    %v207 = vld [vmem:[%s204 + $0x8] sm:$0xf]
    %v208 = vld [vmem:[%s204 + $0xc] sm:$0xf]
    %v209 = vld [vmem:[%s204 + $0x10] sm:$0xf]
    %v210 = vld [vmem:[%s204 + $0x14] sm:$0xf]
    %v211 = vld [vmem:[%s204 + $0x18] sm:$0xf]
    %v212 = vld [vmem:[%s204 + $0x1c] sm:$0xf]
    %v213 = vld [vmem:[%s204 + $0x20] sm:$0xf]
    %v214 = vld [vmem:[%s204 + $0x24] sm:$0xf]
    %v215 = vld [vmem:[%s204 + $0x28] sm:$0xf]
    %v216 = vld [vmem:[%s204 + $0x2c] sm:$0xf]
    %v217 = vld [vmem:[%s204 + $0x30] sm:$0xf]
    %v218 = vld [vmem:[%s204 + $0x34] sm:$0xf]
    %v219 = vld [vmem:[%s204 + $0x38] sm:$0xf]
    %v220 = vld [vmem:[%s204 + $0x3c] sm:$0xf]
    %s221 = scalar_lea.vmem %s3, 1
    %v222 = vld [vmem:[%s221] sm:$0x1]
    %v224 = vlaneseq
    %v225 = vshrl.u32 %v224, 7
    %v226 = vsub.s32 0, %v225
    %v227 = vrot.slane %v222, %v226
    %v245 = vunpack.c.l.b16 %v205
    %v246 = vunpack.c.l.b16 %v206
    %v247 = vunpack.c.l.b16 %v207
    %v248 = vunpack.c.l.b16 %v208
    %v249 = vunpack.c.l.b16 %v209
    %v250 = vunpack.c.l.b16 %v210
    %v251 = vunpack.c.l.b16 %v211
    %v252 = vunpack.c.l.b16 %v212
    %v253 = vunpack.c.l.b16 %v213
    %v254 = vunpack.c.l.b16 %v214
    %v255 = vunpack.c.l.b16 %v215
    %v256 = vunpack.c.l.b16 %v216
    %v257 = vunpack.c.l.b16 %v217
    %v258 = vunpack.c.l.b16 %v218
    %v259 = vunpack.c.l.b16 %v219
    %v260 = vunpack.c.l.b16 %v220
    %v261 = vpack.c.b16 %v246, %v245
    %v262 = vpack.c.b16 %v248, %v247
    %v263 = vpack.c.b16 %v250, %v249
    %v264 = vpack.c.b16 %v252, %v251
    %v265 = vpack.c.b16 %v254, %v253
    %v266 = vpack.c.b16 %v256, %v255
    %v267 = vpack.c.b16 %v258, %v257
    %v268 = vpack.c.b16 %v260, %v259
    %277 = vmatprep.subr.bf16.mxu0 0
    %278 = vmatpush1.bf16.msra.mxu0 %v261
    %279 = vmatprep.subr.bf16.mxu0 0
    %280 = vmatpush1.bf16.msra.mxu0 %v262
    %281 = vmatprep.subr.bf16.mxu0 0
    %282 = vmatpush1.bf16.msra.mxu0 %v263
    %283 = vmatprep.subr.bf16.mxu0 0
    %284 = vmatpush1.bf16.msra.mxu0 %v264
    %285 = vmatprep.subr.bf16.mxu0 0
    %286 = vmatpush1.bf16.msra.mxu0 %v265
    %287 = vmatprep.subr.bf16.mxu0 0
    %288 = vmatpush1.bf16.msra.mxu0 %v266
    %289 = vmatprep.subr.bf16.mxu0 0
    %290 = vmatpush1.bf16.msra.mxu0 %v267
    %291 = vmatprep.subr.bf16.mxu0 0
    %292 = vmatpush1.bf16.msra.mxu0 %v268
    %293 = vmatprep.subr.bf16.mxu0 0
    %294 = vmatpush1.bf16.msra.mxu0 0
    %295 = vmatprep.subr.bf16.mxu0 0
    %296 = vmatpush1.bf16.msra.mxu0 0
    %297 = vmatprep.subr.bf16.mxu0 0
    %298 = vmatpush1.bf16.msra.mxu0 0
    %299 = vmatprep.subr.bf16.mxu0 0
    %300 = vmatpush1.bf16.msra.mxu0 0
    %301 = vmatprep.subr.bf16.mxu0 0
    %302 = vmatpush1.bf16.msra.mxu0 0
    %303 = vmatprep.subr.bf16.mxu0 0
    %304 = vmatpush1.bf16.msra.mxu0 0
    %305 = vmatprep.subr.bf16.mxu0 0
    %306 = vmatpush1.bf16.msra.mxu0 0
    %307 = vmatprep.subr.bf16.mxu0 0
    %308 = vmatpush1.bf16.msra.mxu0 0
    %309 = vmatprep.mubr.bf16.mxu0 0
    %310 = vmatmul.mubr.bf16.gmra.mrb[0].mxu0 %v203
    %v311 = vpop.f32.mrb[0].mxu0
    %v312 = vadd.f32 %v227, %v311
    %v313 = vpop.f32.mrb[0].mxu0
    %v314 = vpop.f32.mrb[0].mxu0
    %v315 = vpop.f32.mrb[0].mxu0
    %316 = vdwg.mxu0
    %v317 = vpack.c.bf16 %v312, %v312
    %v318 = vmul.bf16 %v317, %v317
    %v319 = vmul.bf16 %v317, %v318
    %v320 = vmul.bf16 %v319, 1027030327
    %v321 = vadd.bf16 %v317, %v320
    %v322 = vmul.bf16 %v321, 1061961548
    %v323 = vtanh.bf16.pop %v322
    %v324 = vadd.bf16 %v323, 1065369472
    %v325 = vmul.bf16 %v324, 1056980736
    %v326 = vmul.bf16 %v317, %v325
    %s327 = scalar_lea.vmem [#allocation6], 128
    %v328 = vld [vmem:[%s327] sm:$0xf]
    %v329 = vld [vmem:[%s327 + $0x4] sm:$0xf]
    %v330 = vld [vmem:[%s327 + $0x8] sm:$0xf]
    %v331 = vld [vmem:[%s327 + $0xc] sm:$0xf]
    %v332 = vld [vmem:[%s327 + $0x10] sm:$0xf]
    %v333 = vld [vmem:[%s327 + $0x14] sm:$0xf]
    %v334 = vld [vmem:[%s327 + $0x18] sm:$0xf]
    %v335 = vld [vmem:[%s327 + $0x1c] sm:$0xf]
    %v336 = vld [vmem:[%s327 + $0x20] sm:$0xf]
    %v337 = vld [vmem:[%s327 + $0x24] sm:$0xf]
    %v338 = vld [vmem:[%s327 + $0x28] sm:$0xf]
    %v339 = vld [vmem:[%s327 + $0x2c] sm:$0xf]
    %v340 = vld [vmem:[%s327 + $0x30] sm:$0xf]
    %v341 = vld [vmem:[%s327 + $0x34] sm:$0xf]
    %v342 = vld [vmem:[%s327 + $0x38] sm:$0xf]
    %v343 = vld [vmem:[%s327 + $0x3c] sm:$0xf]
    %s344 = scalar_lea.vmem %s3, 2
    %v345 = vld [vmem:[%s344] sm:$0x1]
    %v347 = vlaneseq
    %v348 = vshrl.u32 %v347, 7
    %v349 = vsub.s32 0, %v348
    %v350 = vrot.slane %v345, %v349
    %v368 = vunpack.c.l.b16 %v328
    %v369 = vunpack.c.l.b16 %v329
    %v370 = vunpack.c.l.b16 %v330
    %v371 = vunpack.c.l.b16 %v331
    %v372 = vunpack.c.l.b16 %v332
    %v373 = vunpack.c.l.b16 %v333
    %v374 = vunpack.c.l.b16 %v334
    %v375 = vunpack.c.l.b16 %v335
    %v376 = vunpack.c.l.b16 %v336
    %v377 = vunpack.c.l.b16 %v337
    %v378 = vunpack.c.l.b16 %v338
    %v379 = vunpack.c.l.b16 %v339
    %v380 = vunpack.c.l.b16 %v340
    %v381 = vunpack.c.l.b16 %v341
    %v382 = vunpack.c.l.b16 %v342
    %v383 = vunpack.c.l.b16 %v343
    %v384 = vpack.c.b16 %v369, %v368
    %v385 = vpack.c.b16 %v371, %v370
    %v386 = vpack.c.b16 %v373, %v372
    %v387 = vpack.c.b16 %v375, %v374
    %v388 = vpack.c.b16 %v377, %v376
    %v389 = vpack.c.b16 %v379, %v378
    %v390 = vpack.c.b16 %v381, %v380
    %v391 = vpack.c.b16 %v383, %v382
    %400 = vmatprep.subr.bf16.mxu0 0
    %401 = vmatpush1.bf16.msra.mxu0 %v384
    %402 = vmatprep.subr.bf16.mxu0 0
    %403 = vmatpush1.bf16.msra.mxu0 %v385
    %404 = vmatprep.subr.bf16.mxu0 0
    %405 = vmatpush1.bf16.msra.mxu0 %v386
    %406 = vmatprep.subr.bf16.mxu0 0
    %407 = vmatpush1.bf16.msra.mxu0 %v387
    %408 = vmatprep.subr.bf16.mxu0 0
    %409 = vmatpush1.bf16.msra.mxu0 %v388
    %410 = vmatprep.subr.bf16.mxu0 0
    %411 = vmatpush1.bf16.msra.mxu0 %v389
    %412 = vmatprep.subr.bf16.mxu0 0
    %413 = vmatpush1.bf16.msra.mxu0 %v390
    %414 = vmatprep.subr.bf16.mxu0 0
    %415 = vmatpush1.bf16.msra.mxu0 %v391
    %416 = vmatprep.subr.bf16.mxu0 0
    %417 = vmatpush1.bf16.msra.mxu0 0
    %418 = vmatprep.subr.bf16.mxu0 0
    %419 = vmatpush1.bf16.msra.mxu0 0
    %420 = vmatprep.subr.bf16.mxu0 0
    %421 = vmatpush1.bf16.msra.mxu0 0
    %422 = vmatprep.subr.bf16.mxu0 0
    %423 = vmatpush1.bf16.msra.mxu0 0
    %424 = vmatprep.subr.bf16.mxu0 0
    %425 = vmatpush1.bf16.msra.mxu0 0
    %426 = vmatprep.subr.bf16.mxu0 0
    %427 = vmatpush1.bf16.msra.mxu0 0
    %428 = vmatprep.subr.bf16.mxu0 0
    %429 = vmatpush1.bf16.msra.mxu0 0
    %430 = vmatprep.subr.bf16.mxu0 0
    %431 = vmatpush1.bf16.msra.mxu0 0
    %432 = vmatprep.mubr.bf16.mxu0 0
    %433 = vmatmul.mubr.bf16.gmra.mrb[0].mxu0 %v326
    %v434 = vpop.f32.mrb[0].mxu0
    %v435 = vadd.f32 %v350, %v434
    %v436 = vpop.f32.mrb[0].mxu0
    %v437 = vpop.f32.mrb[0].mxu0
    %v438 = vpop.f32.mrb[0].mxu0
    %439 = vdwg.mxu0
    %v440 = vpack.c.bf16 %v435, %v435
    %v441 = vmul.bf16 %v440, %v440
    %v442 = vmul.bf16 %v440, %v441
    %v443 = vmul.bf16 %v442, 1027030327
    %v444 = vadd.bf16 %v440, %v443
    %v445 = vmul.bf16 %v444, 1061961548
    %v446 = vtanh.bf16.pop %v445
    %v447 = vadd.bf16 %v446, 1065369472
    %v448 = vmul.bf16 %v447, 1056980736
    %v449 = vmul.bf16 %v440, %v448
    %s450 = scalar_lea.vmem [#allocation6], 192
    %v451 = vld [vmem:[%s450] sm:$0xf]
    %v452 = vld [vmem:[%s450 + $0x4] sm:$0xf]
    %v453 = vld [vmem:[%s450 + $0x8] sm:$0xf]
    %v454 = vld [vmem:[%s450 + $0xc] sm:$0xf]
    %v455 = vld [vmem:[%s450 + $0x10] sm:$0xf]
    %v456 = vld [vmem:[%s450 + $0x14] sm:$0xf]
    %v457 = vld [vmem:[%s450 + $0x18] sm:$0xf]
    %v458 = vld [vmem:[%s450 + $0x1c] sm:$0xf]
    %v459 = vld [vmem:[%s450 + $0x20] sm:$0xf]
    %v460 = vld [vmem:[%s450 + $0x24] sm:$0xf]
    %v461 = vld [vmem:[%s450 + $0x28] sm:$0xf]
    %v462 = vld [vmem:[%s450 + $0x2c] sm:$0xf]
    %v463 = vld [vmem:[%s450 + $0x30] sm:$0xf]
    %v464 = vld [vmem:[%s450 + $0x34] sm:$0xf]
    %v465 = vld [vmem:[%s450 + $0x38] sm:$0xf]
    %v466 = vld [vmem:[%s450 + $0x3c] sm:$0xf]
    %s467 = scalar_lea.vmem %s3, 3
    %v468 = vld [vmem:[%s467] sm:$0x1]
    %v470 = vlaneseq
    %v471 = vshrl.u32 %v470, 7
    %v472 = vsub.s32 0, %v471
    %v473 = vrot.slane %v468, %v472
    %v491 = vunpack.c.l.b16 %v451
    %v492 = vunpack.c.l.b16 %v452
    %v493 = vunpack.c.l.b16 %v453
    %v494 = vunpack.c.l.b16 %v454
    %v495 = vunpack.c.l.b16 %v455
    %v496 = vunpack.c.l.b16 %v456
    %v497 = vunpack.c.l.b16 %v457
    %v498 = vunpack.c.l.b16 %v458
    %v499 = vunpack.c.l.b16 %v459
    %v500 = vunpack.c.l.b16 %v460
    %v501 = vunpack.c.l.b16 %v461
    %v502 = vunpack.c.l.b16 %v462
    %v503 = vunpack.c.l.b16 %v463
    %v504 = vunpack.c.l.b16 %v464
    %v505 = vunpack.c.l.b16 %v465
    %v506 = vunpack.c.l.b16 %v466
    %v507 = vpack.c.b16 %v492, %v491
    %v508 = vpack.c.b16 %v494, %v493
    %v509 = vpack.c.b16 %v496, %v495
    %v510 = vpack.c.b16 %v498, %v497
    %v511 = vpack.c.b16 %v500, %v499
    %v512 = vpack.c.b16 %v502, %v501
    %v513 = vpack.c.b16 %v504, %v503
    %v514 = vpack.c.b16 %v506, %v505
    %523 = vmatprep.subr.bf16.mxu0 0
    %524 = vmatpush1.bf16.msra.mxu0 %v507
    %525 = vmatprep.subr.bf16.mxu0 0
    %526 = vmatpush1.bf16.msra.mxu0 %v508
    %527 = vmatprep.subr.bf16.mxu0 0
    %528 = vmatpush1.bf16.msra.mxu0 %v509
    %529 = vmatprep.subr.bf16.mxu0 0
    %530 = vmatpush1.bf16.msra.mxu0 %v510
    %531 = vmatprep.subr.bf16.mxu0 0
    %532 = vmatpush1.bf16.msra.mxu0 %v511
    %533 = vmatprep.subr.bf16.mxu0 0
    %534 = vmatpush1.bf16.msra.mxu0 %v512
    %535 = vmatprep.subr.bf16.mxu0 0
    %536 = vmatpush1.bf16.msra.mxu0 %v513
    %537 = vmatprep.subr.bf16.mxu0 0
    %538 = vmatpush1.bf16.msra.mxu0 %v514
    %539 = vmatprep.subr.bf16.mxu0 0
    %540 = vmatpush1.bf16.msra.mxu0 0
    %541 = vmatprep.subr.bf16.mxu0 0
    %542 = vmatpush1.bf16.msra.mxu0 0
    %543 = vmatprep.subr.bf16.mxu0 0
    %544 = vmatpush1.bf16.msra.mxu0 0
    %545 = vmatprep.subr.bf16.mxu0 0
    %546 = vmatpush1.bf16.msra.mxu0 0
    %547 = vmatprep.subr.bf16.mxu0 0
    %548 = vmatpush1.bf16.msra.mxu0 0
    %549 = vmatprep.subr.bf16.mxu0 0
    %550 = vmatpush1.bf16.msra.mxu0 0
    %551 = vmatprep.subr.bf16.mxu0 0
    %552 = vmatpush1.bf16.msra.mxu0 0
    %553 = vmatprep.subr.bf16.mxu0 0
    %554 = vmatpush1.bf16.msra.mxu0 0
    %555 = vmatprep.mubr.bf16.mxu0 0
    %556 = vmatmul.mubr.bf16.gmra.mrb[0].mxu0 %v449
    %v557 = vpop.f32.mrb[0].mxu0
    %v558 = vadd.f32 %v473, %v557
    %v559 = vpop.f32.mrb[0].mxu0
    %v560 = vpop.f32.mrb[0].mxu0
    %v561 = vpop.f32.mrb[0].mxu0
    %562 = vdwg.mxu0
    %v563 = vpack.c.bf16 %v558, %v558
    %v564 = vmul.bf16 %v563, %v563
    %v565 = vmul.bf16 %v563, %v564
    %v566 = vmul.bf16 %v565, 1027030327
    %v567 = vadd.bf16 %v563, %v566
    %v568 = vmul.bf16 %v567, 1061961548
    %v569 = vtanh.bf16.pop %v568
    %v570 = vadd.bf16 %v569, 1065369472
    %v571 = vmul.bf16 %v570, 1056980736
    %v572 = vmul.bf16 %v563, %v571
    %v573 = vld [vmem:[#allocation7] sm:$0xff]
    %v574 = vld [vmem:[#allocation7 + $0x8] sm:$0xff]
    %v575 = vld [vmem:[#allocation7 + $0x10] sm:$0xff]
    %v576 = vld [vmem:[#allocation7 + $0x18] sm:$0xff]
    %v577 = vld [vmem:[#allocation7 + $0x20] sm:$0xff]
    %v578 = vld [vmem:[#allocation7 + $0x28] sm:$0xff]
    %v579 = vld [vmem:[#allocation7 + $0x30] sm:$0xff]
    %v580 = vld [vmem:[#allocation7 + $0x38] sm:$0xff]
    %v581 = vld [vmem:[#allocation7 + $0x40] sm:$0xff]
    %v582 = vld [vmem:[#allocation7 + $0x48] sm:$0xff]
    %v583 = vld [vmem:[#allocation7 + $0x50] sm:$0xff]
    %v584 = vld [vmem:[#allocation7 + $0x58] sm:$0xff]
    %v585 = vld [vmem:[#allocation7 + $0x60] sm:$0xff]
    %v586 = vld [vmem:[#allocation7 + $0x68] sm:$0xff]
    %v587 = vld [vmem:[#allocation7 + $0x70] sm:$0xff]
    %v588 = vld [vmem:[#allocation7 + $0x78] sm:$0xff]
    %v589 = vld [vmem:[%s5] sm:$0x3]
    %v591 = vlaneseq
    %v592 = vshrl.u32 %v591, 7
    %v593 = vsub.s32 0, %v592
    %v594 = vrot.slane %v589, %v593
    %v595 = vlaneseq
    %v596 = vshrl.u32 %v595, 7
    %v597 = vsub.s32 1, %v596
    %v598 = vrot.slane %v589, %v597
    %v617 = vunpack.c.l.b16 %v573
    %v618 = vunpack.c.h.b16 %v573
    %v619 = vunpack.c.l.b16 %v574
    %v620 = vunpack.c.h.b16 %v574
    %v621 = vunpack.c.l.b16 %v575
    %v622 = vunpack.c.h.b16 %v575
    %v623 = vunpack.c.l.b16 %v576
    %v624 = vunpack.c.h.b16 %v576
    %v625 = vunpack.c.l.b16 %v577
    %v626 = vunpack.c.h.b16 %v577
    %v627 = vunpack.c.l.b16 %v578
    %v628 = vunpack.c.h.b16 %v578
    %v629 = vunpack.c.l.b16 %v579
    %v630 = vunpack.c.h.b16 %v579
    %v631 = vunpack.c.l.b16 %v580
    %v632 = vunpack.c.h.b16 %v580
    %v633 = vunpack.c.l.b16 %v581
    %v634 = vunpack.c.h.b16 %v581
    %v635 = vunpack.c.l.b16 %v582
    %v636 = vunpack.c.h.b16 %v582
    %v637 = vunpack.c.l.b16 %v583
    %v638 = vunpack.c.h.b16 %v583
    %v639 = vunpack.c.l.b16 %v584
    %v640 = vunpack.c.h.b16 %v584
    %v641 = vunpack.c.l.b16 %v585
    %v642 = vunpack.c.h.b16 %v585
    %v643 = vunpack.c.l.b16 %v586
    %v644 = vunpack.c.h.b16 %v586
    %v645 = vunpack.c.l.b16 %v587
    %v646 = vunpack.c.h.b16 %v587
    %v647 = vunpack.c.l.b16 %v588
    %v648 = vunpack.c.h.b16 %v588
    %v649 = vpack.c.b16 %v619, %v617
    %v650 = vpack.c.b16 %v620, %v618
    %v651 = vpack.c.b16 %v623, %v621
    %v652 = vpack.c.b16 %v624, %v622
    %v653 = vpack.c.b16 %v627, %v625
    %v654 = vpack.c.b16 %v628, %v626
    %v655 = vpack.c.b16 %v631, %v629
    %v656 = vpack.c.b16 %v632, %v630
    %v657 = vpack.c.b16 %v635, %v633
    %v658 = vpack.c.b16 %v636, %v634
    %v659 = vpack.c.b16 %v639, %v637
    %v660 = vpack.c.b16 %v640, %v638
    %v661 = vpack.c.b16 %v643, %v641
    %v662 = vpack.c.b16 %v644, %v642
    %v663 = vpack.c.b16 %v647, %v645
    %v664 = vpack.c.b16 %v648, %v646
    %681 = vmatprep.subr.bf16.mxu0 %v650
    %682 = vmatpush1.bf16.msra.mxu0 %v649
    %683 = vmatprep.subr.bf16.mxu0 %v652
    %684 = vmatpush1.bf16.msra.mxu0 %v651
    %685 = vmatprep.subr.bf16.mxu0 %v654
    %686 = vmatpush1.bf16.msra.mxu0 %v653
    %687 = vmatprep.subr.bf16.mxu0 %v656
    %688 = vmatpush1.bf16.msra.mxu0 %v655
    %689 = vmatprep.subr.bf16.mxu0 %v658
    %690 = vmatpush1.bf16.msra.mxu0 %v657
    %691 = vmatprep.subr.bf16.mxu0 %v660
    %692 = vmatpush1.bf16.msra.mxu0 %v659
    %693 = vmatprep.subr.bf16.mxu0 %v662
    %694 = vmatpush1.bf16.msra.mxu0 %v661
    %695 = vmatprep.subr.bf16.mxu0 %v664
    %696 = vmatpush1.bf16.msra.mxu0 %v663
    %697 = vmatprep.subr.bf16.mxu0 0
    %698 = vmatpush1.bf16.msra.mxu0 0
    %699 = vmatprep.subr.bf16.mxu0 0
    %700 = vmatpush1.bf16.msra.mxu0 0
    %701 = vmatprep.subr.bf16.mxu0 0
    %702 = vmatpush1.bf16.msra.mxu0 0
    %703 = vmatprep.subr.bf16.mxu0 0
    %704 = vmatpush1.bf16.msra.mxu0 0
    %705 = vmatprep.subr.bf16.mxu0 0
    %706 = vmatpush1.bf16.msra.mxu0 0
    %707 = vmatprep.subr.bf16.mxu0 0
    %708 = vmatpush1.bf16.msra.mxu0 0
    %709 = vmatprep.subr.bf16.mxu0 0
    %710 = vmatpush1.bf16.msra.mxu0 0
    %711 = vmatprep.subr.bf16.mxu0 0
    %712 = vmatpush1.bf16.msra.mxu0 0
    %713 = vmatprep.mubr.bf16.mxu0 0
    %714 = vmatmul.mubr.bf16.gmra.mrb[0].mxu0 %v572
    %v715 = vpop.f32.mrb[0].mxu0
    %v716 = vadd.f32 %v594, %v715
    %v717 = vpop.f32.mrb[0].mxu0
    %v718 = vadd.f32 %v598, %v717
    %v719 = vpop.f32.mrb[0].mxu0
    %v720 = vpop.f32.mrb[0].mxu0
    %721 = vdwg.mxu0
    %vm722 = vcmask 64512
    %723 = vst.msk [vmem:[%s7] sm:$0xff] %vm722, %v716
    %724 = vst.msk [vmem:[%s8] sm:$0xff] %vm722, %v718
    %v725 = vld [vmem:[#allocation4] sm:$0xf]
    %v726 = vunpack.c.l.bf16 %v725
    %v727 = vmul.f32 %v718, 0.5
    %v728 = vmul.f32 %v727, 1.442695
    %v729 = vpow.pop %v728
    %v730 = vmul.f32 %v726, %v729
    %v731 = vadd.f32 %v716, %v730
    %v732 = vpack.c.bf16 %v731, %v731
    %s733 = scalar_lea.vmem [#allocation6], 256
    %v734 = vld [vmem:[%s733] sm:$0xf]
    %v735 = vld [vmem:[%s733 + $0x4] sm:$0xf]
    %v736 = vld [vmem:[%s733 + $0x8] sm:$0xf]
    %v737 = vld [vmem:[%s733 + $0xc] sm:$0xf]
    %v738 = vld [vmem:[%s733 + $0x10] sm:$0xf]
    %v739 = vld [vmem:[%s733 + $0x14] sm:$0xf]
    %v740 = vld [vmem:[%s733 + $0x18] sm:$0xf]
    %v741 = vld [vmem:[%s733 + $0x1c] sm:$0xf]
    %v742 = vld [vmem:[%s733 + $0x20] sm:$0xf]
    %v743 = vld [vmem:[%s733 + $0x24] sm:$0xf]
    %v744 = vld [vmem:[%s733 + $0x28] sm:$0xf]
    %v745 = vld [vmem:[%s733 + $0x2c] sm:$0xf]
    %v746 = vld [vmem:[%s733 + $0x30] sm:$0xf]
    %v747 = vld [vmem:[%s733 + $0x34] sm:$0xf]
    %v748 = vld [vmem:[%s733 + $0x38] sm:$0xf]
    %v749 = vld [vmem:[%s733 + $0x3c] sm:$0xf]
    %s750 = scalar_lea.vmem %s3, 4
    %v751 = vld [vmem:[%s750] sm:$0x1]
    %v753 = vlaneseq
    %v754 = vshrl.u32 %v753, 7
    %v755 = vsub.s32 0, %v754
    %v756 = vrot.slane %v751, %v755
    %v774 = vunpack.c.l.b16 %v734
    %v775 = vunpack.c.l.b16 %v735
    %v776 = vunpack.c.l.b16 %v736
    %v777 = vunpack.c.l.b16 %v737
    %v778 = vunpack.c.l.b16 %v738
    %v779 = vunpack.c.l.b16 %v739
    %v780 = vunpack.c.l.b16 %v740
    %v781 = vunpack.c.l.b16 %v741
    %v782 = vunpack.c.l.b16 %v742
    %v783 = vunpack.c.l.b16 %v743
    %v784 = vunpack.c.l.b16 %v744
    %v785 = vunpack.c.l.b16 %v745
    %v786 = vunpack.c.l.b16 %v746
    %v787 = vunpack.c.l.b16 %v747
    %v788 = vunpack.c.l.b16 %v748
    %v789 = vunpack.c.l.b16 %v749
    %v790 = vpack.c.b16 %v775, %v774
    %v791 = vpack.c.b16 %v777, %v776
    %v792 = vpack.c.b16 %v779, %v778
    %v793 = vpack.c.b16 %v781, %v780
    %v794 = vpack.c.b16 %v783, %v782
    %v795 = vpack.c.b16 %v785, %v784
    %v796 = vpack.c.b16 %v787, %v786
    %v797 = vpack.c.b16 %v789, %v788
    %806 = vmatprep.subr.bf16.mxu0 0
    %807 = vmatpush1.bf16.msra.mxu0 %v790
    %808 = vmatprep.subr.bf16.mxu0 0
    %809 = vmatpush1.bf16.msra.mxu0 %v791
    %810 = vmatprep.subr.bf16.mxu0 0
    %811 = vmatpush1.bf16.msra.mxu0 %v792
    %812 = vmatprep.subr.bf16.mxu0 0
    %813 = vmatpush1.bf16.msra.mxu0 %v793
    %814 = vmatprep.subr.bf16.mxu0 0
    %815 = vmatpush1.bf16.msra.mxu0 %v794
    %816 = vmatprep.subr.bf16.mxu0 0
    %817 = vmatpush1.bf16.msra.mxu0 %v795
    %818 = vmatprep.subr.bf16.mxu0 0
    %819 = vmatpush1.bf16.msra.mxu0 %v796
    %820 = vmatprep.subr.bf16.mxu0 0
    %821 = vmatpush1.bf16.msra.mxu0 %v797
    %822 = vmatprep.subr.bf16.mxu0 0
    %823 = vmatpush1.bf16.msra.mxu0 0
    %824 = vmatprep.subr.bf16.mxu0 0
    %825 = vmatpush1.bf16.msra.mxu0 0
    %826 = vmatprep.subr.bf16.mxu0 0
    %827 = vmatpush1.bf16.msra.mxu0 0
    %828 = vmatprep.subr.bf16.mxu0 0
    %829 = vmatpush1.bf16.msra.mxu0 0
    %830 = vmatprep.subr.bf16.mxu0 0
    %831 = vmatpush1.bf16.msra.mxu0 0
    %832 = vmatprep.subr.bf16.mxu0 0
    %833 = vmatpush1.bf16.msra.mxu0 0
    %834 = vmatprep.subr.bf16.mxu0 0
    %835 = vmatpush1.bf16.msra.mxu0 0
    %836 = vmatprep.subr.bf16.mxu0 0
    %837 = vmatpush1.bf16.msra.mxu0 0
    %838 = vmatprep.mubr.bf16.mxu0 0
    %839 = vmatmul.mubr.bf16.gmra.mrb[0].mxu0 %v732
    %v840 = vpop.f32.mrb[0].mxu0
    %v841 = vadd.f32 %v756, %v840
    %v842 = vpop.f32.mrb[0].mxu0
    %v843 = vpop.f32.mrb[0].mxu0
    %v844 = vpop.f32.mrb[0].mxu0
    %845 = vdwg.mxu0
    %v846 = vpack.c.bf16 %v841, %v841
    %v847 = vmul.bf16 %v846, %v846
    %v848 = vmul.bf16 %v846, %v847
    %v849 = vmul.bf16 %v848, 1027030327
    %v850 = vadd.bf16 %v846, %v849
    %v851 = vmul.bf16 %v850, 1061961548
    %v852 = vtanh.bf16.pop %v851
    %v853 = vadd.bf16 %v852, 1065369472
    %v854 = vmul.bf16 %v853, 1056980736
    %v855 = vmul.bf16 %v846, %v854
    %s856 = scalar_lea.vmem [#allocation6], 320
    %v857 = vld [vmem:[%s856] sm:$0xf]
    %v858 = vld [vmem:[%s856 + $0x4] sm:$0xf]
    %v859 = vld [vmem:[%s856 + $0x8] sm:$0xf]
    %v860 = vld [vmem:[%s856 + $0xc] sm:$0xf]
    %v861 = vld [vmem:[%s856 + $0x10] sm:$0xf]
    %v862 = vld [vmem:[%s856 + $0x14] sm:$0xf]
    %v863 = vld [vmem:[%s856 + $0x18] sm:$0xf]
    %v864 = vld [vmem:[%s856 + $0x1c] sm:$0xf]
    %v865 = vld [vmem:[%s856 + $0x20] sm:$0xf]
    %v866 = vld [vmem:[%s856 + $0x24] sm:$0xf]
    %v867 = vld [vmem:[%s856 + $0x28] sm:$0xf]
    %v868 = vld [vmem:[%s856 + $0x2c] sm:$0xf]
    %v869 = vld [vmem:[%s856 + $0x30] sm:$0xf]
    %v870 = vld [vmem:[%s856 + $0x34] sm:$0xf]
    %v871 = vld [vmem:[%s856 + $0x38] sm:$0xf]
    %v872 = vld [vmem:[%s856 + $0x3c] sm:$0xf]
    %s873 = scalar_lea.vmem %s3, 5
    %v874 = vld [vmem:[%s873] sm:$0x1]
    %v876 = vlaneseq
    %v877 = vshrl.u32 %v876, 7
    %v878 = vsub.s32 0, %v877
    %v879 = vrot.slane %v874, %v878
    %v897 = vunpack.c.l.b16 %v857
    %v898 = vunpack.c.l.b16 %v858
    %v899 = vunpack.c.l.b16 %v859
    %v900 = vunpack.c.l.b16 %v860
    %v901 = vunpack.c.l.b16 %v861
    %v902 = vunpack.c.l.b16 %v862
    %v903 = vunpack.c.l.b16 %v863
    %v904 = vunpack.c.l.b16 %v864
    %v905 = vunpack.c.l.b16 %v865
    %v906 = vunpack.c.l.b16 %v866
    %v907 = vunpack.c.l.b16 %v867
    %v908 = vunpack.c.l.b16 %v868
    %v909 = vunpack.c.l.b16 %v869
    %v910 = vunpack.c.l.b16 %v870
    %v911 = vunpack.c.l.b16 %v871
    %v912 = vunpack.c.l.b16 %v872
    %v913 = vpack.c.b16 %v898, %v897
    %v914 = vpack.c.b16 %v900, %v899
    %v915 = vpack.c.b16 %v902, %v901
    %v916 = vpack.c.b16 %v904, %v903
    %v917 = vpack.c.b16 %v906, %v905
    %v918 = vpack.c.b16 %v908, %v907
    %v919 = vpack.c.b16 %v910, %v909
    %v920 = vpack.c.b16 %v912, %v911
    %929 = vmatprep.subr.bf16.mxu0 0
    %930 = vmatpush1.bf16.msra.mxu0 %v913
    %931 = vmatprep.subr.bf16.mxu0 0
    %932 = vmatpush1.bf16.msra.mxu0 %v914
    %933 = vmatprep.subr.bf16.mxu0 0
    %934 = vmatpush1.bf16.msra.mxu0 %v915
    %935 = vmatprep.subr.bf16.mxu0 0
    %936 = vmatpush1.bf16.msra.mxu0 %v916
    %937 = vmatprep.subr.bf16.mxu0 0
    %938 = vmatpush1.bf16.msra.mxu0 %v917
    %939 = vmatprep.subr.bf16.mxu0 0
    %940 = vmatpush1.bf16.msra.mxu0 %v918
    %941 = vmatprep.subr.bf16.mxu0 0
    %942 = vmatpush1.bf16.msra.mxu0 %v919
    %943 = vmatprep.subr.bf16.mxu0 0
    %944 = vmatpush1.bf16.msra.mxu0 %v920
    %945 = vmatprep.subr.bf16.mxu0 0
    %946 = vmatpush1.bf16.msra.mxu0 0
    %947 = vmatprep.subr.bf16.mxu0 0
    %948 = vmatpush1.bf16.msra.mxu0 0
    %949 = vmatprep.subr.bf16.mxu0 0
    %950 = vmatpush1.bf16.msra.mxu0 0
    %951 = vmatprep.subr.bf16.mxu0 0
    %952 = vmatpush1.bf16.msra.mxu0 0
    %953 = vmatprep.subr.bf16.mxu0 0
    %954 = vmatpush1.bf16.msra.mxu0 0
    %955 = vmatprep.subr.bf16.mxu0 0
    %956 = vmatpush1.bf16.msra.mxu0 0
    %957 = vmatprep.subr.bf16.mxu0 0
    %958 = vmatpush1.bf16.msra.mxu0 0
    %959 = vmatprep.subr.bf16.mxu0 0
    %960 = vmatpush1.bf16.msra.mxu0 0
    %961 = vmatprep.mubr.bf16.mxu0 0
    %962 = vmatmul.mubr.bf16.gmra.mrb[0].mxu0 %v855
    %v963 = vpop.f32.mrb[0].mxu0
    %v964 = vadd.f32 %v879, %v963
    %v965 = vpop.f32.mrb[0].mxu0
    %v966 = vpop.f32.mrb[0].mxu0
    %v967 = vpop.f32.mrb[0].mxu0
    %968 = vdwg.mxu0
    %v969 = vpack.c.bf16 %v964, %v964
    %v970 = vmul.bf16 %v969, %v969
    %v971 = vmul.bf16 %v969, %v970
    %v972 = vmul.bf16 %v971, 1027030327
    %v973 = vadd.bf16 %v969, %v972
    %v974 = vmul.bf16 %v973, 1061961548
    %v975 = vtanh.bf16.pop %v974
    %v976 = vadd.bf16 %v975, 1065369472
    %v977 = vmul.bf16 %v976, 1056980736
    %v978 = vmul.bf16 %v969, %v977
    %s979 = scalar_lea.vmem [#allocation6], 384
    %v980 = vld [vmem:[%s979] sm:$0xf]
    %v981 = vld [vmem:[%s979 + $0x4] sm:$0xf]
    %v982 = vld [vmem:[%s979 + $0x8] sm:$0xf]
    %v983 = vld [vmem:[%s979 + $0xc] sm:$0xf]
    %v984 = vld [vmem:[%s979 + $0x10] sm:$0xf]
    %v985 = vld [vmem:[%s979 + $0x14] sm:$0xf]
    %v986 = vld [vmem:[%s979 + $0x18] sm:$0xf]
    %v987 = vld [vmem:[%s979 + $0x1c] sm:$0xf]
    %v988 = vld [vmem:[%s979 + $0x20] sm:$0xf]
    %v989 = vld [vmem:[%s979 + $0x24] sm:$0xf]
    %v990 = vld [vmem:[%s979 + $0x28] sm:$0xf]
    %v991 = vld [vmem:[%s979 + $0x2c] sm:$0xf]
    %v992 = vld [vmem:[%s979 + $0x30] sm:$0xf]
    %v993 = vld [vmem:[%s979 + $0x34] sm:$0xf]
    %v994 = vld [vmem:[%s979 + $0x38] sm:$0xf]
    %v995 = vld [vmem:[%s979 + $0x3c] sm:$0xf]
    %s996 = scalar_lea.vmem %s3, 6
    %v997 = vld [vmem:[%s996] sm:$0x1]
    %v999 = vlaneseq
    %v1000 = vshrl.u32 %v999, 7
    %v1001 = vsub.s32 0, %v1000
    %v1002 = vrot.slane %v997, %v1001
    %v1020 = vunpack.c.l.b16 %v980
    %v1021 = vunpack.c.l.b16 %v981
    %v1022 = vunpack.c.l.b16 %v982
    %v1023 = vunpack.c.l.b16 %v983
    %v1024 = vunpack.c.l.b16 %v984
    %v1025 = vunpack.c.l.b16 %v985
    %v1026 = vunpack.c.l.b16 %v986
    %v1027 = vunpack.c.l.b16 %v987
    %v1028 = vunpack.c.l.b16 %v988
    %v1029 = vunpack.c.l.b16 %v989
    %v1030 = vunpack.c.l.b16 %v990
    %v1031 = vunpack.c.l.b16 %v991
    %v1032 = vunpack.c.l.b16 %v992
    %v1033 = vunpack.c.l.b16 %v993
    %v1034 = vunpack.c.l.b16 %v994
    %v1035 = vunpack.c.l.b16 %v995
    %v1036 = vpack.c.b16 %v1021, %v1020
    %v1037 = vpack.c.b16 %v1023, %v1022
    %v1038 = vpack.c.b16 %v1025, %v1024
    %v1039 = vpack.c.b16 %v1027, %v1026
    %v1040 = vpack.c.b16 %v1029, %v1028
    %v1041 = vpack.c.b16 %v1031, %v1030
    %v1042 = vpack.c.b16 %v1033, %v1032
    %v1043 = vpack.c.b16 %v1035, %v1034
    %1052 = vmatprep.subr.bf16.mxu0 0
    %1053 = vmatpush1.bf16.msra.mxu0 %v1036
    %1054 = vmatprep.subr.bf16.mxu0 0
    %1055 = vmatpush1.bf16.msra.mxu0 %v1037
    %1056 = vmatprep.subr.bf16.mxu0 0
    %1057 = vmatpush1.bf16.msra.mxu0 %v1038
    %1058 = vmatprep.subr.bf16.mxu0 0
    %1059 = vmatpush1.bf16.msra.mxu0 %v1039
    %1060 = vmatprep.subr.bf16.mxu0 0
    %1061 = vmatpush1.bf16.msra.mxu0 %v1040
    %1062 = vmatprep.subr.bf16.mxu0 0
    %1063 = vmatpush1.bf16.msra.mxu0 %v1041
    %1064 = vmatprep.subr.bf16.mxu0 0
    %1065 = vmatpush1.bf16.msra.mxu0 %v1042
    %1066 = vmatprep.subr.bf16.mxu0 0
    %1067 = vmatpush1.bf16.msra.mxu0 %v1043
    %1068 = vmatprep.subr.bf16.mxu0 0
    %1069 = vmatpush1.bf16.msra.mxu0 0
    %1070 = vmatprep.subr.bf16.mxu0 0
    %1071 = vmatpush1.bf16.msra.mxu0 0
    %1072 = vmatprep.subr.bf16.mxu0 0
    %1073 = vmatpush1.bf16.msra.mxu0 0
    %1074 = vmatprep.subr.bf16.mxu0 0
    %1075 = vmatpush1.bf16.msra.mxu0 0
    %1076 = vmatprep.subr.bf16.mxu0 0
    %1077 = vmatpush1.bf16.msra.mxu0 0
    %1078 = vmatprep.subr.bf16.mxu0 0
    %1079 = vmatpush1.bf16.msra.mxu0 0
    %1080 = vmatprep.subr.bf16.mxu0 0
    %1081 = vmatpush1.bf16.msra.mxu0 0
    %1082 = vmatprep.subr.bf16.mxu0 0
    %1083 = vmatpush1.bf16.msra.mxu0 0
    %1084 = vmatprep.mubr.bf16.mxu0 0
    %1085 = vmatmul.mubr.bf16.gmra.mrb[0].mxu0 %v978
    %v1086 = vpop.f32.mrb[0].mxu0
    %v1087 = vadd.f32 %v1002, %v1086
    %v1088 = vpop.f32.mrb[0].mxu0
    %v1089 = vpop.f32.mrb[0].mxu0
    %v1090 = vpop.f32.mrb[0].mxu0
    %1091 = vdwg.mxu0
    %v1092 = vpack.c.bf16 %v1087, %v1087
    %v1093 = vmul.bf16 %v1092, %v1092
    %v1094 = vmul.bf16 %v1092, %v1093
    %v1095 = vmul.bf16 %v1094, 1027030327
    %v1096 = vadd.bf16 %v1092, %v1095
    %v1097 = vmul.bf16 %v1096, 1061961548
    %v1098 = vtanh.bf16.pop %v1097
    %v1099 = vadd.bf16 %v1098, 1065369472
    %v1100 = vmul.bf16 %v1099, 1056980736
    %v1101 = vmul.bf16 %v1092, %v1100
    %s1102 = scalar_lea.vmem [#allocation6], 448
    %v1103 = vld [vmem:[%s1102] sm:$0xf]
    %v1104 = vld [vmem:[%s1102 + $0x4] sm:$0xf]
    %v1105 = vld [vmem:[%s1102 + $0x8] sm:$0xf]
    %v1106 = vld [vmem:[%s1102 + $0xc] sm:$0xf]
    %v1107 = vld [vmem:[%s1102 + $0x10] sm:$0xf]
    %v1108 = vld [vmem:[%s1102 + $0x14] sm:$0xf]
    %v1109 = vld [vmem:[%s1102 + $0x18] sm:$0xf]
    %v1110 = vld [vmem:[%s1102 + $0x1c] sm:$0xf]
    %v1111 = vld [vmem:[%s1102 + $0x20] sm:$0xf]
    %v1112 = vld [vmem:[%s1102 + $0x24] sm:$0xf]
    %v1113 = vld [vmem:[%s1102 + $0x28] sm:$0xf]
    %v1114 = vld [vmem:[%s1102 + $0x2c] sm:$0xf]
    %v1115 = vld [vmem:[%s1102 + $0x30] sm:$0xf]
    %v1116 = vld [vmem:[%s1102 + $0x34] sm:$0xf]
    %v1117 = vld [vmem:[%s1102 + $0x38] sm:$0xf]
    %v1118 = vld [vmem:[%s1102 + $0x3c] sm:$0xf]
    %s1119 = scalar_lea.vmem %s3, 7
    %v1120 = vld [vmem:[%s1119] sm:$0x1]
    %v1122 = vlaneseq
    %v1123 = vshrl.u32 %v1122, 7
    %v1124 = vsub.s32 0, %v1123
    %v1125 = vrot.slane %v1120, %v1124
    %v1143 = vunpack.c.l.b16 %v1103
    %v1144 = vunpack.c.l.b16 %v1104
    %v1145 = vunpack.c.l.b16 %v1105
    %v1146 = vunpack.c.l.b16 %v1106
    %v1147 = vunpack.c.l.b16 %v1107
    %v1148 = vunpack.c.l.b16 %v1108
    %v1149 = vunpack.c.l.b16 %v1109
    %v1150 = vunpack.c.l.b16 %v1110
    %v1151 = vunpack.c.l.b16 %v1111
    %v1152 = vunpack.c.l.b16 %v1112
    %v1153 = vunpack.c.l.b16 %v1113
    %v1154 = vunpack.c.l.b16 %v1114
    %v1155 = vunpack.c.l.b16 %v1115
    %v1156 = vunpack.c.l.b16 %v1116
    %v1157 = vunpack.c.l.b16 %v1117
    %v1158 = vunpack.c.l.b16 %v1118
    %v1159 = vpack.c.b16 %v1144, %v1143
    %v1160 = vpack.c.b16 %v1146, %v1145
    %v1161 = vpack.c.b16 %v1148, %v1147
    %v1162 = vpack.c.b16 %v1150, %v1149
    %v1163 = vpack.c.b16 %v1152, %v1151
    %v1164 = vpack.c.b16 %v1154, %v1153
    %v1165 = vpack.c.b16 %v1156, %v1155
    %v1166 = vpack.c.b16 %v1158, %v1157
    %1175 = vmatprep.subr.bf16.mxu0 0
    %1176 = vmatpush1.bf16.msra.mxu0 %v1159
    %1177 = vmatprep.subr.bf16.mxu0 0
    %1178 = vmatpush1.bf16.msra.mxu0 %v1160
    %1179 = vmatprep.subr.bf16.mxu0 0
    %1180 = vmatpush1.bf16.msra.mxu0 %v1161
    %1181 = vmatprep.subr.bf16.mxu0 0
    %1182 = vmatpush1.bf16.msra.mxu0 %v1162
    %1183 = vmatprep.subr.bf16.mxu0 0
    %1184 = vmatpush1.bf16.msra.mxu0 %v1163
    %1185 = vmatprep.subr.bf16.mxu0 0
    %1186 = vmatpush1.bf16.msra.mxu0 %v1164
    %1187 = vmatprep.subr.bf16.mxu0 0
    %1188 = vmatpush1.bf16.msra.mxu0 %v1165
    %1189 = vmatprep.subr.bf16.mxu0 0
    %1190 = vmatpush1.bf16.msra.mxu0 %v1166
    %1191 = vmatprep.subr.bf16.mxu0 0
    %1192 = vmatpush1.bf16.msra.mxu0 0
    %1193 = vmatprep.subr.bf16.mxu0 0
    %1194 = vmatpush1.bf16.msra.mxu0 0
    %1195 = vmatprep.subr.bf16.mxu0 0
    %1196 = vmatpush1.bf16.msra.mxu0 0
    %1197 = vmatprep.subr.bf16.mxu0 0
    %1198 = vmatpush1.bf16.msra.mxu0 0
    %1199 = vmatprep.subr.bf16.mxu0 0
    %1200 = vmatpush1.bf16.msra.mxu0 0
    %1201 = vmatprep.subr.bf16.mxu0 0
    %1202 = vmatpush1.bf16.msra.mxu0 0
    %1203 = vmatprep.subr.bf16.mxu0 0
    %1204 = vmatpush1.bf16.msra.mxu0 0
    %1205 = vmatprep.subr.bf16.mxu0 0
    %1206 = vmatpush1.bf16.msra.mxu0 0
    %1207 = vmatprep.mubr.bf16.mxu0 0
    %1208 = vmatmul.mubr.bf16.gmra.mrb[0].mxu0 %v1101
    %v1209 = vpop.f32.mrb[0].mxu0
    %v1210 = vadd.f32 %v1125, %v1209
    %v1211 = vpop.f32.mrb[0].mxu0
    %v1212 = vpop.f32.mrb[0].mxu0
    %v1213 = vpop.f32.mrb[0].mxu0
    %1214 = vdwg.mxu0
    %v1215 = vpack.c.bf16 %v1210, %v1210
    %v1216 = vmul.bf16 %v1215, %v1215
    %v1217 = vmul.bf16 %v1215, %v1216
    %v1218 = vmul.bf16 %v1217, 1027030327
    %v1219 = vadd.bf16 %v1215, %v1218
    %v1220 = vmul.bf16 %v1219, 1061961548
    %v1221 = vtanh.bf16.pop %v1220
    %v1222 = vadd.bf16 %v1221, 1065369472
    %v1223 = vmul.bf16 %v1222, 1056980736
    %v1224 = vmul.bf16 %v1215, %v1223
    %s1225 = scalar_lea.vmem [#allocation6], 512
    %v1226 = vld [vmem:[%s1225] sm:$0xf]
    %v1227 = vld [vmem:[%s1225 + $0x4] sm:$0xf]
    %v1228 = vld [vmem:[%s1225 + $0x8] sm:$0xf]
    %v1229 = vld [vmem:[%s1225 + $0xc] sm:$0xf]
    %v1230 = vld [vmem:[%s1225 + $0x10] sm:$0xf]
    %v1231 = vld [vmem:[%s1225 + $0x14] sm:$0xf]
    %v1232 = vld [vmem:[%s1225 + $0x18] sm:$0xf]
    %v1233 = vld [vmem:[%s1225 + $0x1c] sm:$0xf]
    %v1234 = vld [vmem:[%s1225 + $0x20] sm:$0xf]
    %v1235 = vld [vmem:[%s1225 + $0x24] sm:$0xf]
    %v1236 = vld [vmem:[%s1225 + $0x28] sm:$0xf]
    %v1237 = vld [vmem:[%s1225 + $0x2c] sm:$0xf]
    %v1238 = vld [vmem:[%s1225 + $0x30] sm:$0xf]
    %v1239 = vld [vmem:[%s1225 + $0x34] sm:$0xf]
    %v1240 = vld [vmem:[%s1225 + $0x38] sm:$0xf]
    %v1241 = vld [vmem:[%s1225 + $0x3c] sm:$0xf]
    %s1242 = scalar_lea.vmem %s3, 8
    %v1243 = vld [vmem:[%s1242] sm:$0x1]
    %v1245 = vlaneseq
    %v1246 = vshrl.u32 %v1245, 7
    %v1247 = vsub.s32 0, %v1246
    %v1248 = vrot.slane %v1243, %v1247
    %v1266 = vunpack.c.l.b16 %v1226
    %v1267 = vunpack.c.l.b16 %v1227
    %v1268 = vunpack.c.l.b16 %v1228
    %v1269 = vunpack.c.l.b16 %v1229
    %v1270 = vunpack.c.l.b16 %v1230
    %v1271 = vunpack.c.l.b16 %v1231
    %v1272 = vunpack.c.l.b16 %v1232
    %v1273 = vunpack.c.l.b16 %v1233
    %v1274 = vunpack.c.l.b16 %v1234
    %v1275 = vunpack.c.l.b16 %v1235
    %v1276 = vunpack.c.l.b16 %v1236
    %v1277 = vunpack.c.l.b16 %v1237
    %v1278 = vunpack.c.l.b16 %v1238
    %v1279 = vunpack.c.l.b16 %v1239
    %v1280 = vunpack.c.l.b16 %v1240
    %v1281 = vunpack.c.l.b16 %v1241
    %v1282 = vpack.c.b16 %v1267, %v1266
    %v1283 = vpack.c.b16 %v1269, %v1268
    %v1284 = vpack.c.b16 %v1271, %v1270
    %v1285 = vpack.c.b16 %v1273, %v1272
    %v1286 = vpack.c.b16 %v1275, %v1274
    %v1287 = vpack.c.b16 %v1277, %v1276
    %v1288 = vpack.c.b16 %v1279, %v1278
    %v1289 = vpack.c.b16 %v1281, %v1280
    %1298 = vmatprep.subr.bf16.mxu0 0
    %1299 = vmatpush1.bf16.msra.mxu0 %v1282
    %1300 = vmatprep.subr.bf16.mxu0 0
    %1301 = vmatpush1.bf16.msra.mxu0 %v1283
    %1302 = vmatprep.subr.bf16.mxu0 0
    %1303 = vmatpush1.bf16.msra.mxu0 %v1284
    %1304 = vmatprep.subr.bf16.mxu0 0
    %1305 = vmatpush1.bf16.msra.mxu0 %v1285
    %1306 = vmatprep.subr.bf16.mxu0 0
    %1307 = vmatpush1.bf16.msra.mxu0 %v1286
    %1308 = vmatprep.subr.bf16.mxu0 0
    %1309 = vmatpush1.bf16.msra.mxu0 %v1287
    %1310 = vmatprep.subr.bf16.mxu0 0
    %1311 = vmatpush1.bf16.msra.mxu0 %v1288
    %1312 = vmatprep.subr.bf16.mxu0 0
    %1313 = vmatpush1.bf16.msra.mxu0 %v1289
    %1314 = vmatprep.subr.bf16.mxu0 0
    %1315 = vmatpush1.bf16.msra.mxu0 0
    %1316 = vmatprep.subr.bf16.mxu0 0
    %1317 = vmatpush1.bf16.msra.mxu0 0
    %1318 = vmatprep.subr.bf16.mxu0 0
    %1319 = vmatpush1.bf16.msra.mxu0 0
    %1320 = vmatprep.subr.bf16.mxu0 0
    %1321 = vmatpush1.bf16.msra.mxu0 0
    %1322 = vmatprep.subr.bf16.mxu0 0
    %1323 = vmatpush1.bf16.msra.mxu0 0
    %1324 = vmatprep.subr.bf16.mxu0 0
    %1325 = vmatpush1.bf16.msra.mxu0 0
    %1326 = vmatprep.subr.bf16.mxu0 0
    %1327 = vmatpush1.bf16.msra.mxu0 0
    %1328 = vmatprep.subr.bf16.mxu0 0
    %1329 = vmatpush1.bf16.msra.mxu0 0
    %1330 = vmatprep.mubr.bf16.mxu0 0
    %1331 = vmatmul.mubr.bf16.gmra.mrb[0].mxu0 %v1224
    %v1332 = vpop.f32.mrb[0].mxu0
    %v1333 = vadd.f32 %v1248, %v1332
    %v1334 = vpop.f32.mrb[0].mxu0
    %v1335 = vpop.f32.mrb[0].mxu0
    %v1336 = vpop.f32.mrb[0].mxu0
    %1337 = vdwg.mxu0
    %vm1338 = vcmask 261120
    %1339 = vst.msk [vmem:[%s6] sm:$0xff] %vm1338, %v1333
    // Predicated region
    $region42: #{vae_forward.1} parent=1 // pred_check
      _
    $region43: #{vae_forward.1} parent=1 // pred_check_branch
      %1341 = sbr.rel (0) target = $region45
    $region44: #{vae_forward.1} parent=1 // pred_region
      _
    $region45: #{vae_forward.1} parent=1 // pred_fallthru
      _
    // Predicated region
    $region46: #{vae_forward.1} parent=1 // pred_check
      _
    $region47: #{vae_forward.1} parent=1 // pred_check_branch
      %1343 = sbr.rel (0) target = $region49
    $region48: #{vae_forward.1} parent=1 // pred_region
      _
    $region49: #{vae_forward.1} parent=1 // pred_fallthru
      _
    // Predicated region
    $region50: #{vae_forward.1} parent=1 // pred_check
      _
    $region51: #{vae_forward.1} parent=1 // pred_check_branch
      %1345 = sbr.rel (0) target = $region53
    $region52: #{vae_forward.1} parent=1 // pred_region
      _
    $region53: #{vae_forward.1} parent=1 // pred_fallthru
      _
    // Predicated region
    $region54: #{vae_forward.1} parent=1 // pred_check
      _
    $region55: #{vae_forward.1} parent=1 // pred_check_branch
      %1347 = sbr.rel (0) target = $region57
    $region56: #{vae_forward.1} parent=1 // pred_region
      _
    $region57: #{vae_forward.1} parent=1 // pred_fallthru
      _
    // Predicated region
    $region58: #{vae_forward.1} parent=1 // pred_check
      _
    $region59: #{vae_forward.1} parent=1 // pred_check_branch
      %1349 = sbr.rel (0) target = $region61
    $region60: #{vae_forward.1} parent=1 // pred_region
      _
    $region61: #{vae_forward.1} parent=1 // pred_fallthru
      _
    // Predicated region
    $region62: #{vae_forward.1} parent=1 // pred_check
      _
    $region63: #{vae_forward.1} parent=1 // pred_check_branch
      %1351 = sbr.rel (0) target = $region65
    $region64: #{vae_forward.1} parent=1 // pred_region
      _
    $region65: #{vae_forward.1} parent=1 // pred_fallthru
      _
    %1352 = vsyncpa [#allocation3], 1
    %1353 = vsyncpa [#allocation5], 1
    %1354 = vsyncpa [#allocation8], 1

</llo_original>
